<compile_context>
chip_gen: v7x
topology: tpu7x:2x2x1
jax: 0.10.0
libtpu: 0.0.40
codegen_flags: <defaults>
</compile_context>

<pallas_src>
import math

import numpy as np
import jax
import jax.numpy as jnp
from jax import lax
from jax.experimental import pallas as pl
from jax.experimental.pallas import tpu as pltpu

WIN_SIZE = 11
WIN_SIGMA = 1.5
K1, K2 = 0.01, 0.03
DATA_RANGE = 1.0

_LANE = 128
_LANE_TARGET = 256   # cap on packed data lanes (bsz * W) per grid step
_TILE_HO = 256       # max output rows per H-tile (input tile = +10 halo rows)


def _gaussian_window(size: int, sigma: float):
    coords = [float(i - size // 2) for i in range(size)]
    g = [math.exp(-(c * c) / (2.0 * sigma * sigma)) for c in coords]
    s = sum(g)
    return tuple(v / s for v in g)


def _valid_filter_matrix_t(length: int, win) -> np.ndarray:
    """Valid-mode 1D conv as a dense (L, L_out) matrix (used by the pure-JAX ref)."""
    ws = len(win)
    l_out = length - ws + 1
    m = np.zeros((l_out, length), dtype=np.float32)
    wv = np.asarray(win, dtype=np.float32)
    for i in range(l_out):
        m[i, i:i + ws] = wv
    return np.ascontiguousarray(m.T)


def _pack_factor(nc: int, w: int) -> int:
    """Largest divisor of nc with bsz*w <= _LANE_TARGET, keeping >= 2 grid steps."""
    best = 1
    for d in range(1, nc + 1):
        if nc % d:
            continue
        if d * w > _LANE_TARGET:
            continue
        if nc // d < min(nc, 2):     # keep at least 2 parallel grid steps (v7x 2-TC)
            continue
        best = d
    return best


def _make_ssim_kernel(win, tile_ho: int, ho: int, need_row_mask: bool):
    ws = len(win)
    c1 = (K1 * DATA_RANGE) ** 2
    c2 = (K2 * DATA_RANGE) ** 2

    def kernel(mask_ref, x_ref, y_ref, out_ref):
        x = x_ref[0, 0]                       # (tile_in, BWp) f32, lane-packed images
        y = y_ref[0, 0]
        bw = x.shape[1]

        # ---- vertical valid Gaussian conv: ONE fused 11-tap loop, 5 accumulators ----
        x0 = x[0:tile_ho, :]
        y0 = y[0:tile_ho, :]
        vx = win[0] * x0
        vy = win[0] * y0
        vxx = win[0] * (x0 * x0)
        vyy = win[0] * (y0 * y0)
        vxy = win[0] * (x0 * y0)
        for k in range(1, ws):
            xk = x[k:k + tile_ho, :]
            yk = y[k:k + tile_ho, :]
            vx = vx + win[k] * xk
            vy = vy + win[k] * yk
            vxx = vxx + win[k] * (xk * xk)
            vyy = vyy + win[k] * (yk * yk)
            vxy = vxy + win[k] * (xk * yk)

        # ---- horizontal valid Gaussian conv: 11 lane rolls (XLU) + FMAs (VPU) ----
        # roll(a, bw - k)[:, j] == a[:, j + k]; wrapped / cross-image columns are
        # zeroed by the column mask before the reduction.
        hx = win[0] * vx
        hy = win[0] * vy
        hxx = win[0] * vxx
        hyy = win[0] * vyy
        hxy = win[0] * vxy
        for k in range(1, ws):
            sh = bw - k
            hx = hx + win[k] * pltpu.roll(vx, sh, axis=1)
            hy = hy + win[k] * pltpu.roll(vy, sh, axis=1)
            hxx = hxx + win[k] * pltpu.roll(vxx, sh, axis=1)
            hyy = hyy + win[k] * pltpu.roll(vyy, sh, axis=1)
            hxy = hxy + win[k] * pltpu.roll(vxy, sh, axis=1)

        mu1_sq = hx * hx
        mu2_sq = hy * hy
        mu1_mu2 = hx * hy
        sigma1_sq = hxx - mu1_sq
        sigma2_sq = hyy - mu2_sq
        sigma12 = hxy - mu1_mu2

        num = (2.0 * mu1_mu2 + c1) * (2.0 * sigma12 + c2)
        den = (mu1_sq + mu2_sq + c1) * (sigma1_sq + sigma2_sq + c2)
        # EUP approx reciprocal + one Newton step (f32-accurate, den > 0 always).
        r = pl.reciprocal(den, approx=True)
        r = r * (2.0 - den * r)
        ssim_map = num * r

        masked = ssim_map * mask_ref[...]     # zero cross-image / pad columns
        if need_row_mask:
            t = pl.program_id(1)
            rows = lax.broadcasted_iota(jnp.int32, masked.shape, 0)
            masked = jnp.where(rows + t * tile_ho < ho, masked, 0.0)

        # Per-step partial sum, broadcast across 128 lanes (unmasked store);
        # no shared accumulator -> both grid axes are "parallel".
        out_ref[...] = jnp.full(out_ref.shape, jnp.sum(masked), out_ref.dtype)

    return kernel


@jax.jit
def ssim_loss(x: jnp.ndarray, y: jnp.ndarray) -> jnp.ndarray:
    """1 - SSIM(x, y), x/y NCHW float32, values assumed in [0, 1]."""
    n, c, h, w = x.shape
    assert h >= WIN_SIZE and w >= WIN_SIZE, "spatial dims must be >= win_size"
    nc = n * c
    ho = h - WIN_SIZE + 1
    wo = w - WIN_SIZE + 1

    bsz = _pack_factor(nc, w)                 # images packed along lanes per step
    nsteps = nc // bsz
    bw = bsz * w
    bw_pad = ((bw + _LANE - 1) // _LANE) * _LANE

    tile_ho = min(ho, _TILE_HO)               # output rows per H-tile
    n_htiles = -(-ho // tile_ho)
    tile_in = tile_ho + WIN_SIZE - 1          # input rows incl. halo
    h_need = n_htiles * tile_ho + WIN_SIZE - 1
    need_row_mask = (ho % tile_ho) != 0

    win = _gaussian_window(WIN_SIZE, WIN_SIGMA)

    # Static column-validity mask: per packed image, only the first `wo` output
    # columns are valid; lane padding and cross-image boundary columns are 0.
    col_mask = np.zeros((1, bw_pad), np.float32)
    for b in range(bsz):
        col_mask[0, b * w:b * w + wo] = 1.0
    col_mask = jnp.asarray(col_mask)

    def pack(a):
        a = a.reshape(nc, h, w).astype(jnp.float32)
        a = a.reshape(nsteps, bsz, h, w).transpose(0, 2, 1, 3).reshape(nsteps, h, bw)
        a = jnp.pad(a, ((0, 0), (0, h_need - h), (0, bw_pad - bw)))
        # Overlapping H-tiles with a (win-1)-row halo, built once in XLA so the
        # kernel keeps simple full-extent BlockSpecs (bounded VMEM working set).
        tiles = [a[:, t * tile_ho:t * tile_ho + tile_in, :] for t in range(n_htiles)]
        return jnp.stack(tiles, axis=1)       # (nsteps, n_htiles, tile_in, bw_pad)

    x_t = pack(x)
    y_t = pack(y)

    kernel = _make_ssim_kernel(win, tile_ho, ho, need_row_mask)

    partial = pl.pallas_call(
        kernel,
        out_shape=jax.ShapeDtypeStruct((nsteps, n_htiles, 1, _LANE), jnp.float32),
        grid=(nsteps, n_htiles),
        in_specs=[
            pl.BlockSpec((1, bw_pad), lambda i, t: (0, 0)),                # col mask
            pl.BlockSpec((1, 1, tile_in, bw_pad), lambda i, t: (i, t, 0, 0)),
            pl.BlockSpec((1, 1, tile_in, bw_pad), lambda i, t: (i, t, 0, 0)),
        ],
        out_specs=pl.BlockSpec((1, 1, 1, _LANE), lambda i, t: (i, t, 0, 0)),
        compiler_params=pltpu.CompilerParams(
            dimension_semantics=("parallel", "parallel"),
            vmem_limit_bytes=48 * 1024 * 1024,   # fits v7x's 64 MiB, > v6e default
        ),
    )(col_mask, x_t, y_t)

    ssim_sum = jnp.sum(partial[:, :, 0, 0])
    mean_ssim = ssim_sum / jnp.float32(nc * ho * wo)
    return 1.0 - mean_ssim


def _ssim_loss_ref(x, y):
    """Pure-JAX (XLA) reference with identical semantics, for validation."""
    n, c, h, w = x.shape
    win = _gaussian_window(WIN_SIZE, WIN_SIGMA)
    gh = jnp.asarray(_valid_filter_matrix_t(h, win)).T          # (Ho, H)
    gw = jnp.asarray(_valid_filter_matrix_t(w, win))            # (W, Wo)

    def filt(img):                                              # (nc, H, W)
        return jnp.einsum("ph,bhw,wq->bpq", gh, img, gw)

    xf = x.reshape(n * c, h, w).astype(jnp.float32)
    yf = y.reshape(n * c, h, w).astype(jnp.float32)
    mu1, mu2 = filt(xf), filt(yf)
    s1 = filt(xf * xf) - mu1 * mu1
    s2 = filt(yf * yf) - mu2 * mu2
    s12 = filt(xf * yf) - mu1 * mu2
    c1 = (K1 * DATA_RANGE) ** 2
    c2 = (K2 * DATA_RANGE) ** 2
    m = ((2 * mu1 * mu2 + c1) * (2 * s12 + c2)) / (
        (mu1 * mu1 + mu2 * mu2 + c1) * (s1 + s2 + c2))
    return 1.0 - jnp.mean(m)


if __name__ == "__main__":
    key = jax.random.PRNGKey(0)
    kx, ky = jax.random.split(key)
    # channel=3 per the SSIM module; spatial must be >= win_size (11).
    x = jax.random.uniform(kx, (2, 3, 16, 16), dtype=jnp.float32)
    y = jax.random.uniform(ky, (2, 3, 16, 16), dtype=jnp.float32)

    loss = ssim_loss(x, y)
    jax.block_until_ready(loss)

    # Sanity 1: loss of identical images is ~0.
    loss_same = ssim_loss(x, x)
    jax.block_until_ready(loss_same)
    assert float(loss_same) < 1e-4, float(loss_same)
    assert 0.0 <= float(loss) <= 2.0, float(loss)

    # Sanity 2: matches a pure-JAX reference of the same math.
    loss_ref = _ssim_loss_ref(x, y)
    jax.block_until_ready(loss_ref)
    assert abs(float(loss) - float(loss_ref)) < 1e-4, (float(loss), float(loss_ref))

    print("KERNEL_OK")
</pallas_src>

<mosaic_0001>
module attributes {stable_mosaic.version = 11 : i64} {
  func.func @kernel(%arg0: i32, %arg1: i32, %arg2: memref<1x128xf32, #tpu.memory_space<vmem>>, %arg3: memref<1x1x16x128xf32, #tpu.memory_space<vmem>>, %arg4: memref<1x1x16x128xf32, #tpu.memory_space<vmem>>, %arg5: memref<1x1x1x128xf32, #tpu.memory_space<vmem>>) attributes {dimension_semantics = [#tpu.dimension_semantics<parallel>, #tpu.dimension_semantics<parallel>], iteration_bounds = array<i64: 2, 1>, scalar_prefetch = 0 : i64, scratch_operands = 0 : i64, tpu.core_type = #tpu.core_type<tc>, window_params = [{pipeline_mode = #tpu.pipeline_mode<synchronous>, transform_indices = @transform_0, window_bounds = array<i64: 1, 128>}, {transform_indices = @transform_1, window_bounds = array<i64: 1, 1, 16, 128>}, {transform_indices = @transform_2, window_bounds = array<i64: 1, 1, 16, 128>}, {transform_indices = @transform_3, window_bounds = array<i64: 1, 1, 1, 128>}]} {
    %c0 = arith.constant 0 : index
    %c0_0 = arith.constant 0 : index
    %c0_1 = arith.constant 0 : index
    %c0_2 = arith.constant 0 : index
    %0 = vector.load %arg3[%c0, %c0_0, %c0_1, %c0_2] : memref<1x1x16x128xf32, #tpu.memory_space<vmem>>, vector<1x1x16x128xf32>
    %1 = vector.shape_cast %0 : vector<1x1x16x128xf32> to vector<16x128xf32>
    %c0_3 = arith.constant 0 : index
    %c0_4 = arith.constant 0 : index
    %c0_5 = arith.constant 0 : index
    %c0_6 = arith.constant 0 : index
    %2 = vector.load %arg4[%c0_3, %c0_4, %c0_5, %c0_6] : memref<1x1x16x128xf32, #tpu.memory_space<vmem>>, vector<1x1x16x128xf32>
    %3 = vector.shape_cast %2 : vector<1x1x16x128xf32> to vector<16x128xf32>
    %4 = vector.extract_strided_slice %1 {offsets = [0, 0], sizes = [6, 128], strides = [1, 1]} : vector<16x128xf32> to vector<6x128xf32>
    %5 = vector.extract_strided_slice %3 {offsets = [0, 0], sizes = [6, 128], strides = [1, 1]} : vector<16x128xf32> to vector<6x128xf32>
    %cst = arith.constant 0.00102838012 : f32
    %6 = vector.broadcast %cst : f32 to vector<6x128xf32>
    %7 = arith.mulf %6, %4 : vector<6x128xf32>
    %cst_7 = arith.constant 0.00102838012 : f32
    %8 = vector.broadcast %cst_7 : f32 to vector<6x128xf32>
    %9 = arith.mulf %8, %5 : vector<6x128xf32>
    %10 = arith.mulf %4, %4 : vector<6x128xf32>
    %cst_8 = arith.constant 0.00102838012 : f32
    %11 = vector.broadcast %cst_8 : f32 to vector<6x128xf32>
    %12 = arith.mulf %11, %10 : vector<6x128xf32>
    %13 = arith.mulf %5, %5 : vector<6x128xf32>
    %cst_9 = arith.constant 0.00102838012 : f32
    %14 = vector.broadcast %cst_9 : f32 to vector<6x128xf32>
    %15 = arith.mulf %14, %13 : vector<6x128xf32>
    %16 = arith.mulf %4, %5 : vector<6x128xf32>
    %cst_10 = arith.constant 0.00102838012 : f32
    %17 = vector.broadcast %cst_10 : f32 to vector<6x128xf32>
    %18 = arith.mulf %17, %16 : vector<6x128xf32>
    %19 = vector.extract_strided_slice %1 {offsets = [1, 0], sizes = [6, 128], strides = [1, 1]} : vector<16x128xf32> to vector<6x128xf32>
    %20 = vector.extract_strided_slice %3 {offsets = [1, 0], sizes = [6, 128], strides = [1, 1]} : vector<16x128xf32> to vector<6x128xf32>
    %cst_11 = arith.constant 0.00759875821 : f32
    %21 = vector.broadcast %cst_11 : f32 to vector<6x128xf32>
    %22 = arith.mulf %21, %19 : vector<6x128xf32>
    %23 = arith.addf %7, %22 : vector<6x128xf32>
    %cst_12 = arith.constant 0.00759875821 : f32
    %24 = vector.broadcast %cst_12 : f32 to vector<6x128xf32>
    %25 = arith.mulf %24, %20 : vector<6x128xf32>
    %26 = arith.addf %9, %25 : vector<6x128xf32>
    %27 = arith.mulf %19, %19 : vector<6x128xf32>
    %cst_13 = arith.constant 0.00759875821 : f32
    %28 = vector.broadcast %cst_13 : f32 to vector<6x128xf32>
    %29 = arith.mulf %28, %27 : vector<6x128xf32>
    %30 = arith.addf %12, %29 : vector<6x128xf32>
    %31 = arith.mulf %20, %20 : vector<6x128xf32>
    %cst_14 = arith.constant 0.00759875821 : f32
    %32 = vector.broadcast %cst_14 : f32 to vector<6x128xf32>
    %33 = arith.mulf %32, %31 : vector<6x128xf32>
    %34 = arith.addf %15, %33 : vector<6x128xf32>
    %35 = arith.mulf %19, %20 : vector<6x128xf32>
    %cst_15 = arith.constant 0.00759875821 : f32
    %36 = vector.broadcast %cst_15 : f32 to vector<6x128xf32>
    %37 = arith.mulf %36, %35 : vector<6x128xf32>
    %38 = arith.addf %18, %37 : vector<6x128xf32>
    %39 = vector.extract_strided_slice %1 {offsets = [2, 0], sizes = [6, 128], strides = [1, 1]} : vector<16x128xf32> to vector<6x128xf32>
    %40 = vector.extract_strided_slice %3 {offsets = [2, 0], sizes = [6, 128], strides = [1, 1]} : vector<16x128xf32> to vector<6x128xf32>
    %cst_16 = arith.constant 0.0360007733 : f32
    %41 = vector.broadcast %cst_16 : f32 to vector<6x128xf32>
    %42 = arith.mulf %41, %39 : vector<6x128xf32>
    %43 = arith.addf %23, %42 : vector<6x128xf32>
    %cst_17 = arith.constant 0.0360007733 : f32
    %44 = vector.broadcast %cst_17 : f32 to vector<6x128xf32>
    %45 = arith.mulf %44, %40 : vector<6x128xf32>
    %46 = arith.addf %26, %45 : vector<6x128xf32>
    %47 = arith.mulf %39, %39 : vector<6x128xf32>
    %cst_18 = arith.constant 0.0360007733 : f32
    %48 = vector.broadcast %cst_18 : f32 to vector<6x128xf32>
    %49 = arith.mulf %48, %47 : vector<6x128xf32>
    %50 = arith.addf %30, %49 : vector<6x128xf32>
    %51 = arith.mulf %40, %40 : vector<6x128xf32>
    %cst_19 = arith.constant 0.0360007733 : f32
    %52 = vector.broadcast %cst_19 : f32 to vector<6x128xf32>
    %53 = arith.mulf %52, %51 : vector<6x128xf32>
    %54 = arith.addf %34, %53 : vector<6x128xf32>
    %55 = arith.mulf %39, %40 : vector<6x128xf32>
    %cst_20 = arith.constant 0.0360007733 : f32
    %56 = vector.broadcast %cst_20 : f32 to vector<6x128xf32>
    %57 = arith.mulf %56, %55 : vector<6x128xf32>
    %58 = arith.addf %38, %57 : vector<6x128xf32>
    %59 = vector.extract_strided_slice %1 {offsets = [3, 0], sizes = [6, 128], strides = [1, 1]} : vector<16x128xf32> to vector<6x128xf32>
    %60 = vector.extract_strided_slice %3 {offsets = [3, 0], sizes = [6, 128], strides = [1, 1]} : vector<16x128xf32> to vector<6x128xf32>
    %cst_21 = arith.constant 0.109360687 : f32
    %61 = vector.broadcast %cst_21 : f32 to vector<6x128xf32>
    %62 = arith.mulf %61, %59 : vector<6x128xf32>
    %63 = arith.addf %43, %62 : vector<6x128xf32>
    %cst_22 = arith.constant 0.109360687 : f32
    %64 = vector.broadcast %cst_22 : f32 to vector<6x128xf32>
    %65 = arith.mulf %64, %60 : vector<6x128xf32>
    %66 = arith.addf %46, %65 : vector<6x128xf32>
    %67 = arith.mulf %59, %59 : vector<6x128xf32>
    %cst_23 = arith.constant 0.109360687 : f32
    %68 = vector.broadcast %cst_23 : f32 to vector<6x128xf32>
    %69 = arith.mulf %68, %67 : vector<6x128xf32>
    %70 = arith.addf %50, %69 : vector<6x128xf32>
    %71 = arith.mulf %60, %60 : vector<6x128xf32>
    %cst_24 = arith.constant 0.109360687 : f32
    %72 = vector.broadcast %cst_24 : f32 to vector<6x128xf32>
    %73 = arith.mulf %72, %71 : vector<6x128xf32>
    %74 = arith.addf %54, %73 : vector<6x128xf32>
    %75 = arith.mulf %59, %60 : vector<6x128xf32>
    %cst_25 = arith.constant 0.109360687 : f32
    %76 = vector.broadcast %cst_25 : f32 to vector<6x128xf32>
    %77 = arith.mulf %76, %75 : vector<6x128xf32>
    %78 = arith.addf %58, %77 : vector<6x128xf32>
    %79 = vector.extract_strided_slice %1 {offsets = [4, 0], sizes = [6, 128], strides = [1, 1]} : vector<16x128xf32> to vector<6x128xf32>
    %80 = vector.extract_strided_slice %3 {offsets = [4, 0], sizes = [6, 128], strides = [1, 1]} : vector<16x128xf32> to vector<6x128xf32>
    %cst_26 = arith.constant 0.213005543 : f32
    %81 = vector.broadcast %cst_26 : f32 to vector<6x128xf32>
    %82 = arith.mulf %81, %79 : vector<6x128xf32>
    %83 = arith.addf %63, %82 : vector<6x128xf32>
    %cst_27 = arith.constant 0.213005543 : f32
    %84 = vector.broadcast %cst_27 : f32 to vector<6x128xf32>
    %85 = arith.mulf %84, %80 : vector<6x128xf32>
    %86 = arith.addf %66, %85 : vector<6x128xf32>
    %87 = arith.mulf %79, %79 : vector<6x128xf32>
    %cst_28 = arith.constant 0.213005543 : f32
    %88 = vector.broadcast %cst_28 : f32 to vector<6x128xf32>
    %89 = arith.mulf %88, %87 : vector<6x128xf32>
    %90 = arith.addf %70, %89 : vector<6x128xf32>
    %91 = arith.mulf %80, %80 : vector<6x128xf32>
    %cst_29 = arith.constant 0.213005543 : f32
    %92 = vector.broadcast %cst_29 : f32 to vector<6x128xf32>
    %93 = arith.mulf %92, %91 : vector<6x128xf32>
    %94 = arith.addf %74, %93 : vector<6x128xf32>
    %95 = arith.mulf %79, %80 : vector<6x128xf32>
    %cst_30 = arith.constant 0.213005543 : f32
    %96 = vector.broadcast %cst_30 : f32 to vector<6x128xf32>
    %97 = arith.mulf %96, %95 : vector<6x128xf32>
    %98 = arith.addf %78, %97 : vector<6x128xf32>
    %99 = vector.extract_strided_slice %1 {offsets = [5, 0], sizes = [6, 128], strides = [1, 1]} : vector<16x128xf32> to vector<6x128xf32>
    %100 = vector.extract_strided_slice %3 {offsets = [5, 0], sizes = [6, 128], strides = [1, 1]} : vector<16x128xf32> to vector<6x128xf32>
    %cst_31 = arith.constant 0.266011715 : f32
    %101 = vector.broadcast %cst_31 : f32 to vector<6x128xf32>
    %102 = arith.mulf %101, %99 : vector<6x128xf32>
    %103 = arith.addf %83, %102 : vector<6x128xf32>
    %cst_32 = arith.constant 0.266011715 : f32
    %104 = vector.broadcast %cst_32 : f32 to vector<6x128xf32>
    %105 = arith.mulf %104, %100 : vector<6x128xf32>
    %106 = arith.addf %86, %105 : vector<6x128xf32>
    %107 = arith.mulf %99, %99 : vector<6x128xf32>
    %cst_33 = arith.constant 0.266011715 : f32
    %108 = vector.broadcast %cst_33 : f32 to vector<6x128xf32>
    %109 = arith.mulf %108, %107 : vector<6x128xf32>
    %110 = arith.addf %90, %109 : vector<6x128xf32>
    %111 = arith.mulf %100, %100 : vector<6x128xf32>
    %cst_34 = arith.constant 0.266011715 : f32
    %112 = vector.broadcast %cst_34 : f32 to vector<6x128xf32>
    %113 = arith.mulf %112, %111 : vector<6x128xf32>
    %114 = arith.addf %94, %113 : vector<6x128xf32>
    %115 = arith.mulf %99, %100 : vector<6x128xf32>
    %cst_35 = arith.constant 0.266011715 : f32
    %116 = vector.broadcast %cst_35 : f32 to vector<6x128xf32>
    %117 = arith.mulf %116, %115 : vector<6x128xf32>
    %118 = arith.addf %98, %117 : vector<6x128xf32>
    %119 = vector.extract_strided_slice %1 {offsets = [6, 0], sizes = [6, 128], strides = [1, 1]} : vector<16x128xf32> to vector<6x128xf32>
    %120 = vector.extract_strided_slice %3 {offsets = [6, 0], sizes = [6, 128], strides = [1, 1]} : vector<16x128xf32> to vector<6x128xf32>
    %cst_36 = arith.constant 0.213005543 : f32
    %121 = vector.broadcast %cst_36 : f32 to vector<6x128xf32>
    %122 = arith.mulf %121, %119 : vector<6x128xf32>
    %123 = arith.addf %103, %122 : vector<6x128xf32>
    %cst_37 = arith.constant 0.213005543 : f32
    %124 = vector.broadcast %cst_37 : f32 to vector<6x128xf32>
    %125 = arith.mulf %124, %120 : vector<6x128xf32>
    %126 = arith.addf %106, %125 : vector<6x128xf32>
    %127 = arith.mulf %119, %119 : vector<6x128xf32>
    %cst_38 = arith.constant 0.213005543 : f32
    %128 = vector.broadcast %cst_38 : f32 to vector<6x128xf32>
    %129 = arith.mulf %128, %127 : vector<6x128xf32>
    %130 = arith.addf %110, %129 : vector<6x128xf32>
    %131 = arith.mulf %120, %120 : vector<6x128xf32>
    %cst_39 = arith.constant 0.213005543 : f32
    %132 = vector.broadcast %cst_39 : f32 to vector<6x128xf32>
    %133 = arith.mulf %132, %131 : vector<6x128xf32>
    %134 = arith.addf %114, %133 : vector<6x128xf32>
    %135 = arith.mulf %119, %120 : vector<6x128xf32>
    %cst_40 = arith.constant 0.213005543 : f32
    %136 = vector.broadcast %cst_40 : f32 to vector<6x128xf32>
    %137 = arith.mulf %136, %135 : vector<6x128xf32>
    %138 = arith.addf %118, %137 : vector<6x128xf32>
    %139 = vector.extract_strided_slice %1 {offsets = [7, 0], sizes = [6, 128], strides = [1, 1]} : vector<16x128xf32> to vector<6x128xf32>
    %140 = vector.extract_strided_slice %3 {offsets = [7, 0], sizes = [6, 128], strides = [1, 1]} : vector<16x128xf32> to vector<6x128xf32>
    %cst_41 = arith.constant 0.109360687 : f32
    %141 = vector.broadcast %cst_41 : f32 to vector<6x128xf32>
    %142 = arith.mulf %141, %139 : vector<6x128xf32>
    %143 = arith.addf %123, %142 : vector<6x128xf32>
    %cst_42 = arith.constant 0.109360687 : f32
    %144 = vector.broadcast %cst_42 : f32 to vector<6x128xf32>
    %145 = arith.mulf %144, %140 : vector<6x128xf32>
    %146 = arith.addf %126, %145 : vector<6x128xf32>
    %147 = arith.mulf %139, %139 : vector<6x128xf32>
    %cst_43 = arith.constant 0.109360687 : f32
    %148 = vector.broadcast %cst_43 : f32 to vector<6x128xf32>
    %149 = arith.mulf %148, %147 : vector<6x128xf32>
    %150 = arith.addf %130, %149 : vector<6x128xf32>
    %151 = arith.mulf %140, %140 : vector<6x128xf32>
    %cst_44 = arith.constant 0.109360687 : f32
    %152 = vector.broadcast %cst_44 : f32 to vector<6x128xf32>
    %153 = arith.mulf %152, %151 : vector<6x128xf32>
    %154 = arith.addf %134, %153 : vector<6x128xf32>
    %155 = arith.mulf %139, %140 : vector<6x128xf32>
    %cst_45 = arith.constant 0.109360687 : f32
    %156 = vector.broadcast %cst_45 : f32 to vector<6x128xf32>
    %157 = arith.mulf %156, %155 : vector<6x128xf32>
    %158 = arith.addf %138, %157 : vector<6x128xf32>
    %159 = vector.extract_strided_slice %1 {offsets = [8, 0], sizes = [6, 128], strides = [1, 1]} : vector<16x128xf32> to vector<6x128xf32>
    %160 = vector.extract_strided_slice %3 {offsets = [8, 0], sizes = [6, 128], strides = [1, 1]} : vector<16x128xf32> to vector<6x128xf32>
    %cst_46 = arith.constant 0.0360007733 : f32
    %161 = vector.broadcast %cst_46 : f32 to vector<6x128xf32>
    %162 = arith.mulf %161, %159 : vector<6x128xf32>
    %163 = arith.addf %143, %162 : vector<6x128xf32>
    %cst_47 = arith.constant 0.0360007733 : f32
    %164 = vector.broadcast %cst_47 : f32 to vector<6x128xf32>
    %165 = arith.mulf %164, %160 : vector<6x128xf32>
    %166 = arith.addf %146, %165 : vector<6x128xf32>
    %167 = arith.mulf %159, %159 : vector<6x128xf32>
    %cst_48 = arith.constant 0.0360007733 : f32
    %168 = vector.broadcast %cst_48 : f32 to vector<6x128xf32>
    %169 = arith.mulf %168, %167 : vector<6x128xf32>
    %170 = arith.addf %150, %169 : vector<6x128xf32>
    %171 = arith.mulf %160, %160 : vector<6x128xf32>
    %cst_49 = arith.constant 0.0360007733 : f32
    %172 = vector.broadcast %cst_49 : f32 to vector<6x128xf32>
    %173 = arith.mulf %172, %171 : vector<6x128xf32>
    %174 = arith.addf %154, %173 : vector<6x128xf32>
    %175 = arith.mulf %159, %160 : vector<6x128xf32>
    %cst_50 = arith.constant 0.0360007733 : f32
    %176 = vector.broadcast %cst_50 : f32 to vector<6x128xf32>
    %177 = arith.mulf %176, %175 : vector<6x128xf32>
    %178 = arith.addf %158, %177 : vector<6x128xf32>
    %179 = vector.extract_strided_slice %1 {offsets = [9, 0], sizes = [6, 128], strides = [1, 1]} : vector<16x128xf32> to vector<6x128xf32>
    %180 = vector.extract_strided_slice %3 {offsets = [9, 0], sizes = [6, 128], strides = [1, 1]} : vector<16x128xf32> to vector<6x128xf32>
    %cst_51 = arith.constant 0.00759875821 : f32
    %181 = vector.broadcast %cst_51 : f32 to vector<6x128xf32>
    %182 = arith.mulf %181, %179 : vector<6x128xf32>
    %183 = arith.addf %163, %182 : vector<6x128xf32>
    %cst_52 = arith.constant 0.00759875821 : f32
    %184 = vector.broadcast %cst_52 : f32 to vector<6x128xf32>
    %185 = arith.mulf %184, %180 : vector<6x128xf32>
    %186 = arith.addf %166, %185 : vector<6x128xf32>
    %187 = arith.mulf %179, %179 : vector<6x128xf32>
    %cst_53 = arith.constant 0.00759875821 : f32
    %188 = vector.broadcast %cst_53 : f32 to vector<6x128xf32>
    %189 = arith.mulf %188, %187 : vector<6x128xf32>
    %190 = arith.addf %170, %189 : vector<6x128xf32>
    %191 = arith.mulf %180, %180 : vector<6x128xf32>
    %cst_54 = arith.constant 0.00759875821 : f32
    %192 = vector.broadcast %cst_54 : f32 to vector<6x128xf32>
    %193 = arith.mulf %192, %191 : vector<6x128xf32>
    %194 = arith.addf %174, %193 : vector<6x128xf32>
    %195 = arith.mulf %179, %180 : vector<6x128xf32>
    %cst_55 = arith.constant 0.00759875821 : f32
    %196 = vector.broadcast %cst_55 : f32 to vector<6x128xf32>
    %197 = arith.mulf %196, %195 : vector<6x128xf32>
    %198 = arith.addf %178, %197 : vector<6x128xf32>
    %199 = vector.extract_strided_slice %1 {offsets = [10, 0], sizes = [6, 128], strides = [1, 1]} : vector<16x128xf32> to vector<6x128xf32>
    %200 = vector.extract_strided_slice %3 {offsets = [10, 0], sizes = [6, 128], strides = [1, 1]} : vector<16x128xf32> to vector<6x128xf32>
    %cst_56 = arith.constant 0.00102838012 : f32
    %201 = vector.broadcast %cst_56 : f32 to vector<6x128xf32>
    %202 = arith.mulf %201, %199 : vector<6x128xf32>
    %203 = arith.addf %183, %202 : vector<6x128xf32>
    %cst_57 = arith.constant 0.00102838012 : f32
    %204 = vector.broadcast %cst_57 : f32 to vector<6x128xf32>
    %205 = arith.mulf %204, %200 : vector<6x128xf32>
    %206 = arith.addf %186, %205 : vector<6x128xf32>
    %207 = arith.mulf %199, %199 : vector<6x128xf32>
    %cst_58 = arith.constant 0.00102838012 : f32
    %208 = vector.broadcast %cst_58 : f32 to vector<6x128xf32>
    %209 = arith.mulf %208, %207 : vector<6x128xf32>
    %210 = arith.addf %190, %209 : vector<6x128xf32>
    %211 = arith.mulf %200, %200 : vector<6x128xf32>
    %cst_59 = arith.constant 0.00102838012 : f32
    %212 = vector.broadcast %cst_59 : f32 to vector<6x128xf32>
    %213 = arith.mulf %212, %211 : vector<6x128xf32>
    %214 = arith.addf %194, %213 : vector<6x128xf32>
    %215 = arith.mulf %199, %200 : vector<6x128xf32>
    %cst_60 = arith.constant 0.00102838012 : f32
    %216 = vector.broadcast %cst_60 : f32 to vector<6x128xf32>
    %217 = arith.mulf %216, %215 : vector<6x128xf32>
    %218 = arith.addf %198, %217 : vector<6x128xf32>
    %cst_61 = arith.constant 0.00102838012 : f32
    %219 = vector.broadcast %cst_61 : f32 to vector<6x128xf32>
    %220 = arith.mulf %219, %203 : vector<6x128xf32>
    %cst_62 = arith.constant 0.00102838012 : f32
    %221 = vector.broadcast %cst_62 : f32 to vector<6x128xf32>
    %222 = arith.mulf %221, %206 : vector<6x128xf32>
    %cst_63 = arith.constant 0.00102838012 : f32
    %223 = vector.broadcast %cst_63 : f32 to vector<6x128xf32>
    %224 = arith.mulf %223, %210 : vector<6x128xf32>
    %cst_64 = arith.constant 0.00102838012 : f32
    %225 = vector.broadcast %cst_64 : f32 to vector<6x128xf32>
    %226 = arith.mulf %225, %214 : vector<6x128xf32>
    %cst_65 = arith.constant 0.00102838012 : f32
    %227 = vector.broadcast %cst_65 : f32 to vector<6x128xf32>
    %228 = arith.mulf %227, %218 : vector<6x128xf32>
    %c127_i32 = arith.constant 127 : i32
    %229 = tpu.dynamic_rotate %203 by %c127_i32 dim 1 : vector<6x128xf32>, i32 -> vector<6x128xf32>
    %cst_66 = arith.constant 0.00759875821 : f32
    %230 = vector.broadcast %cst_66 : f32 to vector<6x128xf32>
    %231 = arith.mulf %230, %229 : vector<6x128xf32>
    %232 = arith.addf %220, %231 : vector<6x128xf32>
    %c127_i32_67 = arith.constant 127 : i32
    %233 = tpu.dynamic_rotate %206 by %c127_i32_67 dim 1 : vector<6x128xf32>, i32 -> vector<6x128xf32>
    %cst_68 = arith.constant 0.00759875821 : f32
    %234 = vector.broadcast %cst_68 : f32 to vector<6x128xf32>
    %235 = arith.mulf %234, %233 : vector<6x128xf32>
    %236 = arith.addf %222, %235 : vector<6x128xf32>
    %c127_i32_69 = arith.constant 127 : i32
    %237 = tpu.dynamic_rotate %210 by %c127_i32_69 dim 1 : vector<6x128xf32>, i32 -> vector<6x128xf32>
    %cst_70 = arith.constant 0.00759875821 : f32
    %238 = vector.broadcast %cst_70 : f32 to vector<6x128xf32>
    %239 = arith.mulf %238, %237 : vector<6x128xf32>
    %240 = arith.addf %224, %239 : vector<6x128xf32>
    %c127_i32_71 = arith.constant 127 : i32
    %241 = tpu.dynamic_rotate %214 by %c127_i32_71 dim 1 : vector<6x128xf32>, i32 -> vector<6x128xf32>
    %cst_72 = arith.constant 0.00759875821 : f32
    %242 = vector.broadcast %cst_72 : f32 to vector<6x128xf32>
    %243 = arith.mulf %242, %241 : vector<6x128xf32>
    %244 = arith.addf %226, %243 : vector<6x128xf32>
    %c127_i32_73 = arith.constant 127 : i32
    %245 = tpu.dynamic_rotate %218 by %c127_i32_73 dim 1 : vector<6x128xf32>, i32 -> vector<6x128xf32>
    %cst_74 = arith.constant 0.00759875821 : f32
    %246 = vector.broadcast %cst_74 : f32 to vector<6x128xf32>
    %247 = arith.mulf %246, %245 : vector<6x128xf32>
    %248 = arith.addf %228, %247 : vector<6x128xf32>
    %c126_i32 = arith.constant 126 : i32
    %249 = tpu.dynamic_rotate %203 by %c126_i32 dim 1 : vector<6x128xf32>, i32 -> vector<6x128xf32>
    %cst_75 = arith.constant 0.0360007733 : f32
    %250 = vector.broadcast %cst_75 : f32 to vector<6x128xf32>
    %251 = arith.mulf %250, %249 : vector<6x128xf32>
    %252 = arith.addf %232, %251 : vector<6x128xf32>
    %c126_i32_76 = arith.constant 126 : i32
    %253 = tpu.dynamic_rotate %206 by %c126_i32_76 dim 1 : vector<6x128xf32>, i32 -> vector<6x128xf32>
    %cst_77 = arith.constant 0.0360007733 : f32
    %254 = vector.broadcast %cst_77 : f32 to vector<6x128xf32>
    %255 = arith.mulf %254, %253 : vector<6x128xf32>
    %256 = arith.addf %236, %255 : vector<6x128xf32>
    %c126_i32_78 = arith.constant 126 : i32
    %257 = tpu.dynamic_rotate %210 by %c126_i32_78 dim 1 : vector<6x128xf32>, i32 -> vector<6x128xf32>
    %cst_79 = arith.constant 0.0360007733 : f32
    %258 = vector.broadcast %cst_79 : f32 to vector<6x128xf32>
    %259 = arith.mulf %258, %257 : vector<6x128xf32>
    %260 = arith.addf %240, %259 : vector<6x128xf32>
    %c126_i32_80 = arith.constant 126 : i32
    %261 = tpu.dynamic_rotate %214 by %c126_i32_80 dim 1 : vector<6x128xf32>, i32 -> vector<6x128xf32>
    %cst_81 = arith.constant 0.0360007733 : f32
    %262 = vector.broadcast %cst_81 : f32 to vector<6x128xf32>
    %263 = arith.mulf %262, %261 : vector<6x128xf32>
    %264 = arith.addf %244, %263 : vector<6x128xf32>
    %c126_i32_82 = arith.constant 126 : i32
    %265 = tpu.dynamic_rotate %218 by %c126_i32_82 dim 1 : vector<6x128xf32>, i32 -> vector<6x128xf32>
    %cst_83 = arith.constant 0.0360007733 : f32
    %266 = vector.broadcast %cst_83 : f32 to vector<6x128xf32>
    %267 = arith.mulf %266, %265 : vector<6x128xf32>
    %268 = arith.addf %248, %267 : vector<6x128xf32>
    %c125_i32 = arith.constant 125 : i32
    %269 = tpu.dynamic_rotate %203 by %c125_i32 dim 1 : vector<6x128xf32>, i32 -> vector<6x128xf32>
    %cst_84 = arith.constant 0.109360687 : f32
    %270 = vector.broadcast %cst_84 : f32 to vector<6x128xf32>
    %271 = arith.mulf %270, %269 : vector<6x128xf32>
    %272 = arith.addf %252, %271 : vector<6x128xf32>
    %c125_i32_85 = arith.constant 125 : i32
    %273 = tpu.dynamic_rotate %206 by %c125_i32_85 dim 1 : vector<6x128xf32>, i32 -> vector<6x128xf32>
    %cst_86 = arith.constant 0.109360687 : f32
    %274 = vector.broadcast %cst_86 : f32 to vector<6x128xf32>
    %275 = arith.mulf %274, %273 : vector<6x128xf32>
    %276 = arith.addf %256, %275 : vector<6x128xf32>
    %c125_i32_87 = arith.constant 125 : i32
    %277 = tpu.dynamic_rotate %210 by %c125_i32_87 dim 1 : vector<6x128xf32>, i32 -> vector<6x128xf32>
    %cst_88 = arith.constant 0.109360687 : f32
    %278 = vector.broadcast %cst_88 : f32 to vector<6x128xf32>
    %279 = arith.mulf %278, %277 : vector<6x128xf32>
    %280 = arith.addf %260, %279 : vector<6x128xf32>
    %c125_i32_89 = arith.constant 125 : i32
    %281 = tpu.dynamic_rotate %214 by %c125_i32_89 dim 1 : vector<6x128xf32>, i32 -> vector<6x128xf32>
    %cst_90 = arith.constant 0.109360687 : f32
    %282 = vector.broadcast %cst_90 : f32 to vector<6x128xf32>
    %283 = arith.mulf %282, %281 : vector<6x128xf32>
    %284 = arith.addf %264, %283 : vector<6x128xf32>
    %c125_i32_91 = arith.constant 125 : i32
    %285 = tpu.dynamic_rotate %218 by %c125_i32_91 dim 1 : vector<6x128xf32>, i32 -> vector<6x128xf32>
    %cst_92 = arith.constant 0.109360687 : f32
    %286 = vector.broadcast %cst_92 : f32 to vector<6x128xf32>
    %287 = arith.mulf %286, %285 : vector<6x128xf32>
    %288 = arith.addf %268, %287 : vector<6x128xf32>
    %c124_i32 = arith.constant 124 : i32
    %289 = tpu.dynamic_rotate %203 by %c124_i32 dim 1 : vector<6x128xf32>, i32 -> vector<6x128xf32>
    %cst_93 = arith.constant 0.213005543 : f32
    %290 = vector.broadcast %cst_93 : f32 to vector<6x128xf32>
    %291 = arith.mulf %290, %289 : vector<6x128xf32>
    %292 = arith.addf %272, %291 : vector<6x128xf32>
    %c124_i32_94 = arith.constant 124 : i32
    %293 = tpu.dynamic_rotate %206 by %c124_i32_94 dim 1 : vector<6x128xf32>, i32 -> vector<6x128xf32>
    %cst_95 = arith.constant 0.213005543 : f32
    %294 = vector.broadcast %cst_95 : f32 to vector<6x128xf32>
    %295 = arith.mulf %294, %293 : vector<6x128xf32>
    %296 = arith.addf %276, %295 : vector<6x128xf32>
    %c124_i32_96 = arith.constant 124 : i32
    %297 = tpu.dynamic_rotate %210 by %c124_i32_96 dim 1 : vector<6x128xf32>, i32 -> vector<6x128xf32>
    %cst_97 = arith.constant 0.213005543 : f32
    %298 = vector.broadcast %cst_97 : f32 to vector<6x128xf32>
    %299 = arith.mulf %298, %297 : vector<6x128xf32>
    %300 = arith.addf %280, %299 : vector<6x128xf32>
    %c124_i32_98 = arith.constant 124 : i32
    %301 = tpu.dynamic_rotate %214 by %c124_i32_98 dim 1 : vector<6x128xf32>, i32 -> vector<6x128xf32>
    %cst_99 = arith.constant 0.213005543 : f32
    %302 = vector.broadcast %cst_99 : f32 to vector<6x128xf32>
    %303 = arith.mulf %302, %301 : vector<6x128xf32>
    %304 = arith.addf %284, %303 : vector<6x128xf32>
    %c124_i32_100 = arith.constant 124 : i32
    %305 = tpu.dynamic_rotate %218 by %c124_i32_100 dim 1 : vector<6x128xf32>, i32 -> vector<6x128xf32>
    %cst_101 = arith.constant 0.213005543 : f32
    %306 = vector.broadcast %cst_101 : f32 to vector<6x128xf32>
    %307 = arith.mulf %306, %305 : vector<6x128xf32>
    %308 = arith.addf %288, %307 : vector<6x128xf32>
    %c123_i32 = arith.constant 123 : i32
    %309 = tpu.dynamic_rotate %203 by %c123_i32 dim 1 : vector<6x128xf32>, i32 -> vector<6x128xf32>
    %cst_102 = arith.constant 0.266011715 : f32
    %310 = vector.broadcast %cst_102 : f32 to vector<6x128xf32>
    %311 = arith.mulf %310, %309 : vector<6x128xf32>
    %312 = arith.addf %292, %311 : vector<6x128xf32>
    %c123_i32_103 = arith.constant 123 : i32
    %313 = tpu.dynamic_rotate %206 by %c123_i32_103 dim 1 : vector<6x128xf32>, i32 -> vector<6x128xf32>
    %cst_104 = arith.constant 0.266011715 : f32
    %314 = vector.broadcast %cst_104 : f32 to vector<6x128xf32>
    %315 = arith.mulf %314, %313 : vector<6x128xf32>
    %316 = arith.addf %296, %315 : vector<6x128xf32>
    %c123_i32_105 = arith.constant 123 : i32
    %317 = tpu.dynamic_rotate %210 by %c123_i32_105 dim 1 : vector<6x128xf32>, i32 -> vector<6x128xf32>
    %cst_106 = arith.constant 0.266011715 : f32
    %318 = vector.broadcast %cst_106 : f32 to vector<6x128xf32>
    %319 = arith.mulf %318, %317 : vector<6x128xf32>
    %320 = arith.addf %300, %319 : vector<6x128xf32>
    %c123_i32_107 = arith.constant 123 : i32
    %321 = tpu.dynamic_rotate %214 by %c123_i32_107 dim 1 : vector<6x128xf32>, i32 -> vector<6x128xf32>
    %cst_108 = arith.constant 0.266011715 : f32
    %322 = vector.broadcast %cst_108 : f32 to vector<6x128xf32>
    %323 = arith.mulf %322, %321 : vector<6x128xf32>
    %324 = arith.addf %304, %323 : vector<6x128xf32>
    %c123_i32_109 = arith.constant 123 : i32
    %325 = tpu.dynamic_rotate %218 by %c123_i32_109 dim 1 : vector<6x128xf32>, i32 -> vector<6x128xf32>
    %cst_110 = arith.constant 0.266011715 : f32
    %326 = vector.broadcast %cst_110 : f32 to vector<6x128xf32>
    %327 = arith.mulf %326, %325 : vector<6x128xf32>
    %328 = arith.addf %308, %327 : vector<6x128xf32>
    %c122_i32 = arith.constant 122 : i32
    %329 = tpu.dynamic_rotate %203 by %c122_i32 dim 1 : vector<6x128xf32>, i32 -> vector<6x128xf32>
    %cst_111 = arith.constant 0.213005543 : f32
    %330 = vector.broadcast %cst_111 : f32 to vector<6x128xf32>
    %331 = arith.mulf %330, %329 : vector<6x128xf32>
    %332 = arith.addf %312, %331 : vector<6x128xf32>
    %c122_i32_112 = arith.constant 122 : i32
    %333 = tpu.dynamic_rotate %206 by %c122_i32_112 dim 1 : vector<6x128xf32>, i32 -> vector<6x128xf32>
    %cst_113 = arith.constant 0.213005543 : f32
    %334 = vector.broadcast %cst_113 : f32 to vector<6x128xf32>
    %335 = arith.mulf %334, %333 : vector<6x128xf32>
    %336 = arith.addf %316, %335 : vector<6x128xf32>
    %c122_i32_114 = arith.constant 122 : i32
    %337 = tpu.dynamic_rotate %210 by %c122_i32_114 dim 1 : vector<6x128xf32>, i32 -> vector<6x128xf32>
    %cst_115 = arith.constant 0.213005543 : f32
    %338 = vector.broadcast %cst_115 : f32 to vector<6x128xf32>
    %339 = arith.mulf %338, %337 : vector<6x128xf32>
    %340 = arith.addf %320, %339 : vector<6x128xf32>
    %c122_i32_116 = arith.constant 122 : i32
    %341 = tpu.dynamic_rotate %214 by %c122_i32_116 dim 1 : vector<6x128xf32>, i32 -> vector<6x128xf32>
    %cst_117 = arith.constant 0.213005543 : f32
    %342 = vector.broadcast %cst_117 : f32 to vector<6x128xf32>
    %343 = arith.mulf %342, %341 : vector<6x128xf32>
    %344 = arith.addf %324, %343 : vector<6x128xf32>
    %c122_i32_118 = arith.constant 122 : i32
    %345 = tpu.dynamic_rotate %218 by %c122_i32_118 dim 1 : vector<6x128xf32>, i32 -> vector<6x128xf32>
    %cst_119 = arith.constant 0.213005543 : f32
    %346 = vector.broadcast %cst_119 : f32 to vector<6x128xf32>
    %347 = arith.mulf %346, %345 : vector<6x128xf32>
    %348 = arith.addf %328, %347 : vector<6x128xf32>
    %c121_i32 = arith.constant 121 : i32
    %349 = tpu.dynamic_rotate %203 by %c121_i32 dim 1 : vector<6x128xf32>, i32 -> vector<6x128xf32>
    %cst_120 = arith.constant 0.109360687 : f32
    %350 = vector.broadcast %cst_120 : f32 to vector<6x128xf32>
    %351 = arith.mulf %350, %349 : vector<6x128xf32>
    %352 = arith.addf %332, %351 : vector<6x128xf32>
    %c121_i32_121 = arith.constant 121 : i32
    %353 = tpu.dynamic_rotate %206 by %c121_i32_121 dim 1 : vector<6x128xf32>, i32 -> vector<6x128xf32>
    %cst_122 = arith.constant 0.109360687 : f32
    %354 = vector.broadcast %cst_122 : f32 to vector<6x128xf32>
    %355 = arith.mulf %354, %353 : vector<6x128xf32>
    %356 = arith.addf %336, %355 : vector<6x128xf32>
    %c121_i32_123 = arith.constant 121 : i32
    %357 = tpu.dynamic_rotate %210 by %c121_i32_123 dim 1 : vector<6x128xf32>, i32 -> vector<6x128xf32>
    %cst_124 = arith.constant 0.109360687 : f32
    %358 = vector.broadcast %cst_124 : f32 to vector<6x128xf32>
    %359 = arith.mulf %358, %357 : vector<6x128xf32>
    %360 = arith.addf %340, %359 : vector<6x128xf32>
    %c121_i32_125 = arith.constant 121 : i32
    %361 = tpu.dynamic_rotate %214 by %c121_i32_125 dim 1 : vector<6x128xf32>, i32 -> vector<6x128xf32>
    %cst_126 = arith.constant 0.109360687 : f32
    %362 = vector.broadcast %cst_126 : f32 to vector<6x128xf32>
    %363 = arith.mulf %362, %361 : vector<6x128xf32>
    %364 = arith.addf %344, %363 : vector<6x128xf32>
    %c121_i32_127 = arith.constant 121 : i32
    %365 = tpu.dynamic_rotate %218 by %c121_i32_127 dim 1 : vector<6x128xf32>, i32 -> vector<6x128xf32>
    %cst_128 = arith.constant 0.109360687 : f32
    %366 = vector.broadcast %cst_128 : f32 to vector<6x128xf32>
    %367 = arith.mulf %366, %365 : vector<6x128xf32>
    %368 = arith.addf %348, %367 : vector<6x128xf32>
    %c120_i32 = arith.constant 120 : i32
    %369 = tpu.dynamic_rotate %203 by %c120_i32 dim 1 : vector<6x128xf32>, i32 -> vector<6x128xf32>
    %cst_129 = arith.constant 0.0360007733 : f32
    %370 = vector.broadcast %cst_129 : f32 to vector<6x128xf32>
    %371 = arith.mulf %370, %369 : vector<6x128xf32>
    %372 = arith.addf %352, %371 : vector<6x128xf32>
    %c120_i32_130 = arith.constant 120 : i32
    %373 = tpu.dynamic_rotate %206 by %c120_i32_130 dim 1 : vector<6x128xf32>, i32 -> vector<6x128xf32>
    %cst_131 = arith.constant 0.0360007733 : f32
    %374 = vector.broadcast %cst_131 : f32 to vector<6x128xf32>
    %375 = arith.mulf %374, %373 : vector<6x128xf32>
    %376 = arith.addf %356, %375 : vector<6x128xf32>
    %c120_i32_132 = arith.constant 120 : i32
    %377 = tpu.dynamic_rotate %210 by %c120_i32_132 dim 1 : vector<6x128xf32>, i32 -> vector<6x128xf32>
    %cst_133 = arith.constant 0.0360007733 : f32
    %378 = vector.broadcast %cst_133 : f32 to vector<6x128xf32>
    %379 = arith.mulf %378, %377 : vector<6x128xf32>
    %380 = arith.addf %360, %379 : vector<6x128xf32>
    %c120_i32_134 = arith.constant 120 : i32
    %381 = tpu.dynamic_rotate %214 by %c120_i32_134 dim 1 : vector<6x128xf32>, i32 -> vector<6x128xf32>
    %cst_135 = arith.constant 0.0360007733 : f32
    %382 = vector.broadcast %cst_135 : f32 to vector<6x128xf32>
    %383 = arith.mulf %382, %381 : vector<6x128xf32>
    %384 = arith.addf %364, %383 : vector<6x128xf32>
    %c120_i32_136 = arith.constant 120 : i32
    %385 = tpu.dynamic_rotate %218 by %c120_i32_136 dim 1 : vector<6x128xf32>, i32 -> vector<6x128xf32>
    %cst_137 = arith.constant 0.0360007733 : f32
    %386 = vector.broadcast %cst_137 : f32 to vector<6x128xf32>
    %387 = arith.mulf %386, %385 : vector<6x128xf32>
    %388 = arith.addf %368, %387 : vector<6x128xf32>
    %c119_i32 = arith.constant 119 : i32
    %389 = tpu.dynamic_rotate %203 by %c119_i32 dim 1 : vector<6x128xf32>, i32 -> vector<6x128xf32>
    %cst_138 = arith.constant 0.00759875821 : f32
    %390 = vector.broadcast %cst_138 : f32 to vector<6x128xf32>
    %391 = arith.mulf %390, %389 : vector<6x128xf32>
    %392 = arith.addf %372, %391 : vector<6x128xf32>
    %c119_i32_139 = arith.constant 119 : i32
    %393 = tpu.dynamic_rotate %206 by %c119_i32_139 dim 1 : vector<6x128xf32>, i32 -> vector<6x128xf32>
    %cst_140 = arith.constant 0.00759875821 : f32
    %394 = vector.broadcast %cst_140 : f32 to vector<6x128xf32>
    %395 = arith.mulf %394, %393 : vector<6x128xf32>
    %396 = arith.addf %376, %395 : vector<6x128xf32>
    %c119_i32_141 = arith.constant 119 : i32
    %397 = tpu.dynamic_rotate %210 by %c119_i32_141 dim 1 : vector<6x128xf32>, i32 -> vector<6x128xf32>
    %cst_142 = arith.constant 0.00759875821 : f32
    %398 = vector.broadcast %cst_142 : f32 to vector<6x128xf32>
    %399 = arith.mulf %398, %397 : vector<6x128xf32>
    %400 = arith.addf %380, %399 : vector<6x128xf32>
    %c119_i32_143 = arith.constant 119 : i32
    %401 = tpu.dynamic_rotate %214 by %c119_i32_143 dim 1 : vector<6x128xf32>, i32 -> vector<6x128xf32>
    %cst_144 = arith.constant 0.00759875821 : f32
    %402 = vector.broadcast %cst_144 : f32 to vector<6x128xf32>
    %403 = arith.mulf %402, %401 : vector<6x128xf32>
    %404 = arith.addf %384, %403 : vector<6x128xf32>
    %c119_i32_145 = arith.constant 119 : i32
    %405 = tpu.dynamic_rotate %218 by %c119_i32_145 dim 1 : vector<6x128xf32>, i32 -> vector<6x128xf32>
    %cst_146 = arith.constant 0.00759875821 : f32
    %406 = vector.broadcast %cst_146 : f32 to vector<6x128xf32>
    %407 = arith.mulf %406, %405 : vector<6x128xf32>
    %408 = arith.addf %388, %407 : vector<6x128xf32>
    %c118_i32 = arith.constant 118 : i32
    %409 = tpu.dynamic_rotate %203 by %c118_i32 dim 1 : vector<6x128xf32>, i32 -> vector<6x128xf32>
    %cst_147 = arith.constant 0.00102838012 : f32
    %410 = vector.broadcast %cst_147 : f32 to vector<6x128xf32>
    %411 = arith.mulf %410, %409 : vector<6x128xf32>
    %412 = arith.addf %392, %411 : vector<6x128xf32>
    %c118_i32_148 = arith.constant 118 : i32
    %413 = tpu.dynamic_rotate %206 by %c118_i32_148 dim 1 : vector<6x128xf32>, i32 -> vector<6x128xf32>
    %cst_149 = arith.constant 0.00102838012 : f32
    %414 = vector.broadcast %cst_149 : f32 to vector<6x128xf32>
    %415 = arith.mulf %414, %413 : vector<6x128xf32>
    %416 = arith.addf %396, %415 : vector<6x128xf32>
    %c118_i32_150 = arith.constant 118 : i32
    %417 = tpu.dynamic_rotate %210 by %c118_i32_150 dim 1 : vector<6x128xf32>, i32 -> vector<6x128xf32>
    %cst_151 = arith.constant 0.00102838012 : f32
    %418 = vector.broadcast %cst_151 : f32 to vector<6x128xf32>
    %419 = arith.mulf %418, %417 : vector<6x128xf32>
    %420 = arith.addf %400, %419 : vector<6x128xf32>
    %c118_i32_152 = arith.constant 118 : i32
    %421 = tpu.dynamic_rotate %214 by %c118_i32_152 dim 1 : vector<6x128xf32>, i32 -> vector<6x128xf32>
    %cst_153 = arith.constant 0.00102838012 : f32
    %422 = vector.broadcast %cst_153 : f32 to vector<6x128xf32>
    %423 = arith.mulf %422, %421 : vector<6x128xf32>
    %424 = arith.addf %404, %423 : vector<6x128xf32>
    %c118_i32_154 = arith.constant 118 : i32
    %425 = tpu.dynamic_rotate %218 by %c118_i32_154 dim 1 : vector<6x128xf32>, i32 -> vector<6x128xf32>
    %cst_155 = arith.constant 0.00102838012 : f32
    %426 = vector.broadcast %cst_155 : f32 to vector<6x128xf32>
    %427 = arith.mulf %426, %425 : vector<6x128xf32>
    %428 = arith.addf %408, %427 : vector<6x128xf32>
    %429 = arith.mulf %412, %412 : vector<6x128xf32>
    %430 = arith.mulf %416, %416 : vector<6x128xf32>
    %431 = arith.mulf %412, %416 : vector<6x128xf32>
    %432 = arith.subf %420, %429 : vector<6x128xf32>
    %433 = arith.subf %424, %430 : vector<6x128xf32>
    %434 = arith.subf %428, %431 : vector<6x128xf32>
    %cst_156 = arith.constant 2.000000e+00 : f32
    %435 = vector.broadcast %cst_156 : f32 to vector<6x128xf32>
    %436 = arith.mulf %435, %431 : vector<6x128xf32>
    %cst_157 = arith.constant 9.99999974E-5 : f32
    %437 = vector.broadcast %cst_157 : f32 to vector<6x128xf32>
    %438 = arith.addf %436, %437 : vector<6x128xf32>
    %cst_158 = arith.constant 2.000000e+00 : f32
    %439 = vector.broadcast %cst_158 : f32 to vector<6x128xf32>
    %440 = arith.mulf %439, %434 : vector<6x128xf32>
    %cst_159 = arith.constant 8.99999984E-4 : f32
    %441 = vector.broadcast %cst_159 : f32 to vector<6x128xf32>
    %442 = arith.addf %440, %441 : vector<6x128xf32>
    %443 = arith.mulf %438, %442 : vector<6x128xf32>
    %444 = arith.addf %429, %430 : vector<6x128xf32>
    %cst_160 = arith.constant 9.99999974E-5 : f32
    %445 = vector.broadcast %cst_160 : f32 to vector<6x128xf32>
    %446 = arith.addf %444, %445 : vector<6x128xf32>
    %447 = arith.addf %432, %433 : vector<6x128xf32>
    %cst_161 = arith.constant 8.99999984E-4 : f32
    %448 = vector.broadcast %cst_161 : f32 to vector<6x128xf32>
    %449 = arith.addf %447, %448 : vector<6x128xf32>
    %450 = arith.mulf %446, %449 : vector<6x128xf32>
    %451 = tpu.reciprocal %450 {approx = true} : vector<6x128xf32> -> vector<6x128xf32>
    %452 = arith.mulf %450, %451 : vector<6x128xf32>
    %cst_162 = arith.constant 2.000000e+00 : f32
    %453 = vector.broadcast %cst_162 : f32 to vector<6x128xf32>
    %454 = arith.subf %453, %452 : vector<6x128xf32>
    %455 = arith.mulf %451, %454 : vector<6x128xf32>
    %456 = arith.mulf %443, %455 : vector<6x128xf32>
    %c0_163 = arith.constant 0 : index
    %c0_164 = arith.constant 0 : index
    %457 = vector.load %arg2[%c0_163, %c0_164] : memref<1x128xf32, #tpu.memory_space<vmem>>, vector<1x128xf32>
    %458 = vector.broadcast %457 : vector<1x128xf32> to vector<6x128xf32>
    %459 = arith.mulf %456, %458 : vector<6x128xf32>
    %460 = vector.shape_cast %459 : vector<6x128xf32> to vector<1x6x128xf32>
    %cst_165 = arith.constant dense<0.000000e+00> : vector<1xf32>
    %461 = vector.multi_reduction <add>, %460, %cst_165 [1, 2] : vector<1x6x128xf32> to vector<1xf32>
    %462 = vector.shape_cast %461 : vector<1xf32> to vector<1x1x1xf32>
    %463 = vector.extract %462[0, 0, 0] : f32 from vector<1x1x1xf32>
    %464 = vector.broadcast %463 : f32 to vector<1x1x1x128xf32>
    %c0_166 = arith.constant 0 : index
    %c0_167 = arith.constant 0 : index
    %c0_168 = arith.constant 0 : index
    %c0_169 = arith.constant 0 : index
    %465 = vector.load %arg5[%c0_166, %c0_167, %c0_168, %c0_169] : memref<1x1x1x128xf32, #tpu.memory_space<vmem>>, vector<1x1x1x128xf32>
    tpu.vector_store %arg5[%c0_166, %c0_167, %c0_168, %c0_169], %464 {strides = array<i32>} : memref<1x1x1x128xf32, #tpu.memory_space<vmem>>, vector<1x1x1x128xf32>,
    return
  }
  func.func @transform_0(%arg0: i32, %arg1: i32) -> (i32, i32) {
    %c0_i32 = arith.constant 0 : i32
    %c0_i32_0 = arith.constant 0 : i32
    %c0_i32_1 = arith.constant 0 : i32
    return %c0_i32, %c0_i32_0 : i32, i32
  }
  func.func @transform_1(%arg0: i32, %arg1: i32) -> (i32, i32, i32, i32) {
    %c0_i32 = arith.constant 0 : i32
    %c0_i32_0 = arith.constant 0 : i32
    %c0_i32_1 = arith.constant 0 : i32
    return %arg0, %arg1, %c0_i32, %c0_i32_0 : i32, i32, i32, i32
  }
  func.func @transform_2(%arg0: i32, %arg1: i32) -> (i32, i32, i32, i32) {
    %c0_i32 = arith.constant 0 : i32
    %c0_i32_0 = arith.constant 0 : i32
    %c0_i32_1 = arith.constant 0 : i32
    return %arg0, %arg1, %c0_i32, %c0_i32_0 : i32, i32, i32, i32
  }
  func.func @transform_3(%arg0: i32, %arg1: i32) -> (i32, i32, i32, i32) {
    %c0_i32 = arith.constant 0 : i32
    %c0_i32_0 = arith.constant 0 : i32
    %c0_i32_1 = arith.constant 0 : i32
    return %arg0, %arg1, %c0_i32, %c0_i32_0 : i32, i32, i32, i32
  }
}

</mosaic_0001>

<llo_original>
// kernel: ssim_loss.1
$region0: #{ssim_loss.1}
  #allocation0 [shape = 'u32[]', space=smem, size = 0x4, offset = 0x4, fixed_abs, tag = 'smem constant byte address 0x4 - core index']
  #allocation1 [shape = 'u32[144,128]{1,0:T(1,128)}', space=vmem, size = 0x12000, scoped, tag = 'internal scratch']
  %s0 = inlined_call_operand.vmem [shape: f32[1,128], index: 0, kind: input, shape index: {}]
  %s1 = inlined_call_operand.vmem [shape: f32[2,1,16,128], index: 1, kind: input, shape index: {}]
  %s2 = inlined_call_operand.vmem [shape: f32[2,1,16,128], index: 2, kind: input, shape index: {}]
  %s3 = inlined_call_operand.vmem [shape: f32[2,1,1,128], index: 3, kind: output, shape index: {}]
  %s4 = sld [smem:[#allocation0]]
  $region45: #{ssim_loss.1} parent=0
    _
  %s6 = ssub.s32 1, %s4
  %s7 = scalar_select 0, %s6, %s4
  loop: start=0, step=1, limit=4
  $region2: #{ssim_loss.1} parent=0 // loop_pre_header
    _
  $region3: #{ssim_loss.1} parent=0 // loop_header
    %s9 = sphi 0, %s13
    %p10 = scmp.ge.s32.totalorder %s9, 4
    %s16 = sphi 0, %s28
    %s17 = sphi 0, %s24
    %s18 = sphi 0, %s16
    %s19 = sphi 0, %s17
    %s20 = sphi 0, %s18
    %s21 = sphi 0, %s19
    %s29 = sphi 0, %s29
    %s31 = sphi 0, %s29
    %s32 = sphi 0, %s31
    %s46 = sphi 0, %s32
    %s54 = sphi 0, %s56
    %s57 = sphi 0, %s54
    %s58 = sphi 0, %s57
    %s74 = sphi 0, %s58
    %s82 = sphi 0, %s84
    %s85 = sphi 0, %s82
    %s86 = sphi 0, %s85
    %s102 = sphi 0, %s86
    %s110 = sphi 0, %s112
    %s113 = sphi 0, %s110
    %s114 = sphi 0, %s113
    %s130 = sphi 0, %s114
  $region4: #{ssim_loss.1} parent=0 // loop_header_branch
    %12 = sbr.rel (%p10) target = $region8
  $region5: #{ssim_loss.1} parent=0 // loop_body
    %s14 = ssub.s32 %s9, 1
    %s15 = ssub.s32 %s9, 2
    %s22 = sadd.s32 1, %s17
    %p23 = scmp.ge.s32.totalorder %s22, 1
    %s24 = scalar_select %p23, 0, %s22
    %s25 = sadd.s32 1, %s16
    %s26 = scalar_select %p23, %s25, %s16
    %p27 = scmp.ge.s32.totalorder %s26, 2
    %s28 = scalar_select %p27, 0, %s26
    %s30 = sadd.s32 %s29, 1
    %p33 = scmp.eq.s32.totalorder %s9, 1
    %p34 = scmp.ne.s32.totalorder %s29, %s31
    %p35 = scmp.eq.s32.totalorder %s9, 0
    %p36 = por %p34, %p35
    %p37 = scmp.ne.s32.totalorder %s29, %s31
    %p38 = scmp.eq.s32.totalorder %s14, 1
    %p39 = por %p37, %p38
    %p40 = scmp.ne.s32.totalorder %s31, %s32
    %p41 = scmp.eq.s32.totalorder %s14, 0
    %p42 = por %p40, %p41
    %p43 = scmp.ne.s32.totalorder %s31, %s32
    %p44 = scmp.eq.s32.totalorder %s15, 1
    %p45 = por %p43, %p44
    %p47 = scmp.ne.s32.totalorder %s32, %s46
    %p48 = scmp.eq.s32.totalorder %s15, 0
    %p49 = por %p47, %p48
    %s50 = ssub.s32 %s16, %s28
    %s51 = ssub.s32 %s17, %s24
    %s52 = sor.u32 %s50, %s51
    %p53 = scmp.eq.s32.totalorder %s52, 0
    %s55 = sadd.s32 %s54, 1
    %s56 = scalar_select %p53, %s54, %s55
    %p59 = pneg %p53
    %p60 = scmp.eq.s32.totalorder %s9, 1
    %p61 = por %p59, %p60
    %p62 = scmp.ne.s32.totalorder %s54, %s57
    %p63 = scmp.eq.s32.totalorder %s9, 0
    %p64 = por %p62, %p63
    %p65 = scmp.ne.s32.totalorder %s54, %s57
    %p66 = scmp.eq.s32.totalorder %s14, 1
    %p67 = por %p65, %p66
    %p68 = scmp.ne.s32.totalorder %s57, %s58
    %p69 = scmp.eq.s32.totalorder %s14, 0
    %p70 = por %p68, %p69
    %p71 = scmp.ne.s32.totalorder %s57, %s58
    %p72 = scmp.eq.s32.totalorder %s15, 1
    %p73 = por %p71, %p72
    %p75 = scmp.ne.s32.totalorder %s58, %s74
    %p76 = scmp.eq.s32.totalorder %s15, 0
    %p77 = por %p75, %p76
    %s78 = ssub.s32 %s16, %s28
    %s79 = ssub.s32 %s17, %s24
    %s80 = sor.u32 %s78, %s79
    %p81 = scmp.eq.s32.totalorder %s80, 0
    %s83 = sadd.s32 %s82, 1
    %s84 = scalar_select %p81, %s82, %s83
    %p87 = pneg %p81
    %p88 = scmp.eq.s32.totalorder %s9, 1
    %p89 = por %p87, %p88
    %p90 = scmp.ne.s32.totalorder %s82, %s85
    %p91 = scmp.eq.s32.totalorder %s9, 0
    %p92 = por %p90, %p91
    %p93 = scmp.ne.s32.totalorder %s82, %s85
    %p94 = scmp.eq.s32.totalorder %s14, 1
    %p95 = por %p93, %p94
    %p96 = scmp.ne.s32.totalorder %s85, %s86
    %p97 = scmp.eq.s32.totalorder %s14, 0
    %p98 = por %p96, %p97
    %p99 = scmp.ne.s32.totalorder %s85, %s86
    %p100 = scmp.eq.s32.totalorder %s15, 1
    %p101 = por %p99, %p100
    %p103 = scmp.ne.s32.totalorder %s86, %s102
    %p104 = scmp.eq.s32.totalorder %s15, 0
    %p105 = por %p103, %p104
    %s106 = ssub.s32 %s16, %s28
    %s107 = ssub.s32 %s17, %s24
    %s108 = sor.u32 %s106, %s107
    %p109 = scmp.eq.s32.totalorder %s108, 0
    %s111 = sadd.s32 %s110, 1
    %s112 = scalar_select %p109, %s110, %s111
    %p115 = pneg %p109
    %p116 = scmp.eq.s32.totalorder %s9, 1
    %p117 = por %p115, %p116
    %p118 = scmp.ne.s32.totalorder %s110, %s113
    %p119 = scmp.eq.s32.totalorder %s9, 0
    %p120 = por %p118, %p119
    %p121 = scmp.ne.s32.totalorder %s110, %s113
    %p122 = scmp.eq.s32.totalorder %s14, 1
    %p123 = por %p121, %p122
    %p124 = scmp.ne.s32.totalorder %s113, %s114
    %p125 = scmp.eq.s32.totalorder %s14, 0
    %p126 = por %p124, %p125
    %p127 = scmp.ne.s32.totalorder %s113, %s114
    %p128 = scmp.eq.s32.totalorder %s15, 1
    %p129 = por %p127, %p128
    %p131 = scmp.ne.s32.totalorder %s114, %s130
    %p132 = scmp.eq.s32.totalorder %s15, 0
    %p133 = por %p131, %p132
    %p134 = scmp.le.s32.totalorder 1, %s9
    %p135 = scmp.lt.s32.totalorder %s9, 3
    %p136 = pnand %p134, %p135
    %p137 = pneg %p136
    // Predicated region
    $region9: #{ssim_loss.1} parent=5 // pred_check
      _
    $region10: #{ssim_loss.1} parent=5 // pred_check_branch
      %139 = sbr.rel (%p136) target = $region12
    $region11: #{ssim_loss.1} parent=5 // pred_region
      %s140 = ssub.s32 %s9, 1
      // Predicated region
      $region13: #{ssim_loss.1} parent=11 // pred_check
        %p141 = pneg %p42
      $region14: #{ssim_loss.1} parent=11 // pred_check_branch
        %143 = sbr.rel (%p141) target = $region16
      $region15: #{ssim_loss.1} parent=11 // pred_region
        _
      $region16: #{ssim_loss.1} parent=11 // pred_fallthru
        _
    $region12: #{ssim_loss.1} parent=5 // pred_fallthru
      _
    %p144 = scmp.lt.s32.totalorder %s9, 2
    // Predicated region
    $region17: #{ssim_loss.1} parent=5 // pred_check
      %p145 = pneg %p144
    $region18: #{ssim_loss.1} parent=5 // pred_check_branch
      %147 = sbr.rel (%p145) target = $region20
    $region19: #{ssim_loss.1} parent=5 // pred_region
      // Predicated region
      $region21: #{ssim_loss.1} parent=19 // pred_check
        %p148 = pneg %p64
      $region22: #{ssim_loss.1} parent=19 // pred_check_branch
        %150 = sbr.rel (%p148) target = $region24
      $region23: #{ssim_loss.1} parent=19 // pred_region
        %p151 = scmp.lt.s32.totalorder %s16, 1
        %s152 = scalar_select %p151, %s16, 1
        %p153 = scmp.lt.s32.totalorder %s17, 0
        %s154 = scalar_select %p153, %s17, 0
        %s155 = smul.addr %s154, 2
        %s156 = smul.addr %s152, 2
        %s157 = sadd.s32 %s155, %s156
        %s158 = smul.addr %s157, 8
        %s159 = scalar_lea.vmem %s1, %s158
      $region24: #{ssim_loss.1} parent=19 // pred_fallthru
        _
      // Predicated region
      $region25: #{ssim_loss.1} parent=19 // pred_check
        %p160 = pneg %p92
      $region26: #{ssim_loss.1} parent=19 // pred_check_branch
        %162 = sbr.rel (%p160) target = $region28
      $region27: #{ssim_loss.1} parent=19 // pred_region
        %p163 = scmp.lt.s32.totalorder %s16, 1
        %s164 = scalar_select %p163, %s16, 1
        %p165 = scmp.lt.s32.totalorder %s17, 0
        %s166 = scalar_select %p165, %s17, 0
        %s167 = smul.addr %s166, 2
        %s168 = smul.addr %s164, 2
        %s169 = sadd.s32 %s167, %s168
        %s170 = smul.addr %s169, 8
        %s171 = scalar_lea.vmem %s2, %s170
      $region28: #{ssim_loss.1} parent=19 // pred_fallthru
        _
    $region20: #{ssim_loss.1} parent=5 // pred_fallthru
      _
    %p172 = scmp.le.s32.totalorder 1, %s9
    %p173 = scmp.lt.s32.totalorder %s9, 3
    %p174 = pnand %p172, %p173
    %p175 = pneg %p174
    // Predicated region
    $region29: #{ssim_loss.1} parent=5 // pred_check
      _
    $region30: #{ssim_loss.1} parent=5 // pred_check_branch
      %177 = sbr.rel (%p174) target = $region32
    $region31: #{ssim_loss.1} parent=5 // pred_region
      %s178 = ssub.s32 %s9, 1
      %p179 = pneg %p42
      %p180 = pneg %p39
      %p181 = scmp.lt.s32.totalorder %s18, 1
      %s182 = scalar_select %p181, %s18, 1
      %p183 = scmp.lt.s32.totalorder %s19, 0
      %s184 = scalar_select %p183, %s19, 0
      %s185 = smul.addr %s184, 2
      %s186 = smul.addr %s182, 2
      %s187 = sadd.s32 %s185, %s186
      %s188 = smul.addr %s187, 8
      %s189 = scalar_lea.vmem %s1, %s188
      %p190 = pneg %p70
      %p191 = pneg %p67
      %p192 = scmp.lt.s32.totalorder %s18, 1
      %s193 = scalar_select %p192, %s18, 1
      %p194 = scmp.lt.s32.totalorder %s19, 0
      %s195 = scalar_select %p194, %s19, 0
      %s196 = smul.addr %s195, 2
      %s197 = smul.addr %s193, 2
      %s198 = sadd.s32 %s196, %s197
      %s199 = smul.addr %s198, 8
      %s200 = scalar_lea.vmem %s2, %s199
      %p201 = pneg %p98
      %p202 = pneg %p95
      %p203 = pneg %p126
      %p204 = pneg %p123
      %p205 = scmp.lt.s32.totalorder %s18, 1
      %s206 = scalar_select %p205, %s18, 1
      %p207 = scmp.lt.s32.totalorder %s19, 0
      %s208 = scalar_select %p207, %s19, 0
      %s209 = sadd.s32 %s208, %s206
      %s210 = scalar_lea.vmem %s3, %s209
      %p211 = scmp.lt.s32.totalorder %s18, 1
      %s212 = scalar_select %p211, %s18, 1
      %p213 = scmp.lt.s32.totalorder %s19, 0
      %s214 = scalar_select %p213, %s19, 0
      %s215 = smul.addr %s214, 2
      %s216 = smul.addr %s212, 2
      %s217 = sadd.s32 %s215, %s216
      %s218 = smul.addr %s217, 8
      %s219 = scalar_lea.vmem %s1, %s218
      %p220 = scmp.lt.s32.totalorder %s18, 1
      %s221 = scalar_select %p220, %s18, 1
      %p222 = scmp.lt.s32.totalorder %s19, 0
      %s223 = scalar_select %p222, %s19, 0
      %s224 = smul.addr %s223, 2
      %s225 = smul.addr %s221, 2
      %s226 = sadd.s32 %s224, %s225
      %s227 = smul.addr %s226, 8
      %s228 = scalar_lea.vmem %s2, %s227
      %p229 = scmp.lt.s32.totalorder %s18, 1
      %s230 = scalar_select %p229, %s18, 1
      %p231 = scmp.lt.s32.totalorder %s19, 0
      %s232 = scalar_select %p231, %s19, 0
      %s233 = sadd.s32 %s232, %s230
      %s234 = scalar_lea.vmem %s3, %s233
      %v235 = vld [vmem:[%s219] sm:$0xff]
      %v236 = vld [vmem:[%s219 + $0x8] sm:$0xff]
      %v237 = vld [vmem:[%s228] sm:$0xff]
      %v238 = vld [vmem:[%s228 + $0x8] sm:$0xff]
      %v239 = vmul.f32 %v235, 0.0010283801
      %v240 = vmul.f32 %v237, 0.0010283801
      %v241 = vmul.f32 %v235, %v235
      %v242 = vmul.f32 %v241, 0.0010283801
      %v243 = vmul.f32 %v237, %v237
      %v244 = vmul.f32 %v243, 0.0010283801
      %v245 = vmul.f32 %v235, %v237
      %v246 = vmul.f32 %v245, 0.0010283801
      %v247 = vmul.f32 %v235, 0.007598758
      %v249 = vrot.slane %v247, 1
      %v251 = vadd.f32 %v239, %v249
      %v252 = vmul.f32 %v237, 0.007598758
      %v254 = vrot.slane %v252, 1
      %v256 = vadd.f32 %v240, %v254
      %v257 = vmul.f32 %v241, 0.007598758
      %v259 = vrot.slane %v257, 1
      %v261 = vadd.f32 %v242, %v259
      %v262 = vmul.f32 %v243, 0.007598758
      %v264 = vrot.slane %v262, 1
      %v266 = vadd.f32 %v244, %v264
      %v267 = vmul.f32 %v245, 0.007598758
      %v269 = vrot.slane %v267, 1
      %v271 = vadd.f32 %v246, %v269
      %v272 = vmul.f32 %v235, 0.036000773
      %v274 = vrot.slane %v272, 2
      %v276 = vadd.f32 %v251, %v274
      %v277 = vmul.f32 %v237, 0.036000773
      %v279 = vrot.slane %v277, 2
      %v281 = vadd.f32 %v256, %v279
      %v282 = vmul.f32 %v241, 0.036000773
      %v284 = vrot.slane %v282, 2
      %v286 = vadd.f32 %v261, %v284
      %v287 = vmul.f32 %v243, 0.036000773
      %v289 = vrot.slane %v287, 2
      %v291 = vadd.f32 %v266, %v289
      %v292 = vmul.f32 %v245, 0.036000773
      %v294 = vrot.slane %v292, 2
      %v296 = vadd.f32 %v271, %v294
      %v297 = vmul.f32 %v235, 0.10936069
      %v298 = vmul.f32 %v236, 0.10936069
      %vm301 = vcmask 1044480
      %v302 = vrot.slane %v297, 3
      %v303 = vrot.slane %v298, 3
      %v304 = vsel %vm301, %v302, %v303
      %v306 = vadd.f32 %v276, %v304
      %v307 = vmul.f32 %v237, 0.10936069
      %v308 = vmul.f32 %v238, 0.10936069
      %v311 = vrot.slane %v307, 3
      %v312 = vrot.slane %v308, 3
      %v313 = vsel %vm301, %v311, %v312
      %v315 = vadd.f32 %v281, %v313
      %v316 = vmul.f32 %v236, %v236
      %v317 = vmul.f32 %v241, 0.10936069
      %v318 = vmul.f32 %v316, 0.10936069
      %v321 = vrot.slane %v317, 3
      %v322 = vrot.slane %v318, 3
      %v323 = vsel %vm301, %v321, %v322
      %v325 = vadd.f32 %v286, %v323
      %v326 = vmul.f32 %v238, %v238
      %v327 = vmul.f32 %v243, 0.10936069
      %v328 = vmul.f32 %v326, 0.10936069
      %v331 = vrot.slane %v327, 3
      %v332 = vrot.slane %v328, 3
      %v333 = vsel %vm301, %v331, %v332
      %v335 = vadd.f32 %v291, %v333
      %v336 = vmul.f32 %v236, %v238
      %v337 = vmul.f32 %v245, 0.10936069
      %v338 = vmul.f32 %v336, 0.10936069
      %v341 = vrot.slane %v337, 3
      %v342 = vrot.slane %v338, 3
      %v343 = vsel %vm301, %v341, %v342
      %v345 = vadd.f32 %v296, %v343
      %v346 = vmul.f32 %v235, 0.21300554
      %v347 = vmul.f32 %v236, 0.21300554
      %vm350 = vcmask 1043456
      %v351 = vrot.slane %v346, 4
      %v352 = vrot.slane %v347, 4
      %v353 = vsel %vm350, %v351, %v352
      %v355 = vadd.f32 %v306, %v353
      %v356 = vmul.f32 %v237, 0.21300554
      %v357 = vmul.f32 %v238, 0.21300554
      %v360 = vrot.slane %v356, 4
      %v361 = vrot.slane %v357, 4
      %v362 = vsel %vm350, %v360, %v361
      %v364 = vadd.f32 %v315, %v362
      %v365 = vmul.f32 %v241, 0.21300554
      %v366 = vmul.f32 %v316, 0.21300554
      %v369 = vrot.slane %v365, 4
      %v370 = vrot.slane %v366, 4
      %v371 = vsel %vm350, %v369, %v370
      %v373 = vadd.f32 %v325, %v371
      %v374 = vmul.f32 %v243, 0.21300554
      %v375 = vmul.f32 %v326, 0.21300554
      %v378 = vrot.slane %v374, 4
      %v379 = vrot.slane %v375, 4
      %v380 = vsel %vm350, %v378, %v379
      %v382 = vadd.f32 %v335, %v380
      %v383 = vmul.f32 %v245, 0.21300554
      %v384 = vmul.f32 %v336, 0.21300554
      %v387 = vrot.slane %v383, 4
      %v388 = vrot.slane %v384, 4
      %v389 = vsel %vm350, %v387, %v388
      %v391 = vadd.f32 %v345, %v389
      %v392 = vmul.f32 %v235, 0.26601171
      %v393 = vmul.f32 %v236, 0.26601171
      %vm396 = vcmask 1042432
      %v397 = vrot.slane %v392, 5
      %v398 = vrot.slane %v393, 5
      %v399 = vsel %vm396, %v397, %v398
      %v401 = vadd.f32 %v355, %v399
      %v402 = vmul.f32 %v237, 0.26601171
      %v403 = vmul.f32 %v238, 0.26601171
      %v406 = vrot.slane %v402, 5
      %v407 = vrot.slane %v403, 5
      %v408 = vsel %vm396, %v406, %v407
      %v410 = vadd.f32 %v364, %v408
      %v411 = vmul.f32 %v241, 0.26601171
      %v412 = vmul.f32 %v316, 0.26601171
      %v415 = vrot.slane %v411, 5
      %v416 = vrot.slane %v412, 5
      %v417 = vsel %vm396, %v415, %v416
      %v419 = vadd.f32 %v373, %v417
      %v420 = vmul.f32 %v243, 0.26601171
      %v421 = vmul.f32 %v326, 0.26601171
      %v424 = vrot.slane %v420, 5
      %v425 = vrot.slane %v421, 5
      %v426 = vsel %vm396, %v424, %v425
      %v428 = vadd.f32 %v382, %v426
      %v429 = vmul.f32 %v245, 0.26601171
      %v430 = vmul.f32 %v336, 0.26601171
      %v433 = vrot.slane %v429, 5
      %v434 = vrot.slane %v430, 5
      %v435 = vsel %vm396, %v433, %v434
      %v437 = vadd.f32 %v391, %v435
      %vm438 = vcmask 1041408
      %v439 = vrot.slane %v346, 6
      %v440 = vrot.slane %v347, 6
      %v441 = vsel %vm438, %v439, %v440
      %v443 = vadd.f32 %v401, %v441
      %v444 = vrot.slane %v356, 6
      %v445 = vrot.slane %v357, 6
      %v446 = vsel %vm438, %v444, %v445
      %v448 = vadd.f32 %v410, %v446
      %v449 = vrot.slane %v365, 6
      %v450 = vrot.slane %v366, 6
      %v451 = vsel %vm438, %v449, %v450
      %v453 = vadd.f32 %v419, %v451
      %v454 = vrot.slane %v374, 6
      %v455 = vrot.slane %v375, 6
      %v456 = vsel %vm438, %v454, %v455
      %v458 = vadd.f32 %v428, %v456
      %v459 = vrot.slane %v383, 6
      %v460 = vrot.slane %v384, 6
      %v461 = vsel %vm438, %v459, %v460
      %v463 = vadd.f32 %v437, %v461
      %vm464 = vcmask 1040384
      %v465 = vrot.slane %v297, 7
      %v466 = vrot.slane %v298, 7
      %v467 = vsel %vm464, %v465, %v466
      %v469 = vadd.f32 %v443, %v467
      %v470 = vrot.slane %v307, 7
      %v471 = vrot.slane %v308, 7
      %v472 = vsel %vm464, %v470, %v471
      %v474 = vadd.f32 %v448, %v472
      %v475 = vrot.slane %v317, 7
      %v476 = vrot.slane %v318, 7
      %v477 = vsel %vm464, %v475, %v476
      %v479 = vadd.f32 %v453, %v477
      %v480 = vrot.slane %v327, 7
      %v481 = vrot.slane %v328, 7
      %v482 = vsel %vm464, %v480, %v481
      %v484 = vadd.f32 %v458, %v482
      %v485 = vrot.slane %v337, 7
      %v486 = vrot.slane %v338, 7
      %v487 = vsel %vm464, %v485, %v486
      %v489 = vadd.f32 %v463, %v487
      %v490 = vmul.f32 %v236, 0.036000773
      %v491 = vadd.f32 %v469, %v490
      %v492 = vmul.f32 %v238, 0.036000773
      %v493 = vadd.f32 %v474, %v492
      %v494 = vmul.f32 %v316, 0.036000773
      %v495 = vadd.f32 %v479, %v494
      %v496 = vmul.f32 %v326, 0.036000773
      %v497 = vadd.f32 %v484, %v496
      %v498 = vmul.f32 %v336, 0.036000773
      %v499 = vadd.f32 %v489, %v498
      %v500 = vmul.f32 %v236, 0.007598758
      %v502 = vrot.slane %v500, 1
      %v504 = vadd.f32 %v491, %v502
      %v505 = vmul.f32 %v238, 0.007598758
      %v507 = vrot.slane %v505, 1
      %v509 = vadd.f32 %v493, %v507
      %v510 = vmul.f32 %v316, 0.007598758
      %v512 = vrot.slane %v510, 1
      %v514 = vadd.f32 %v495, %v512
      %v515 = vmul.f32 %v326, 0.007598758
      %v517 = vrot.slane %v515, 1
      %v519 = vadd.f32 %v497, %v517
      %v520 = vmul.f32 %v336, 0.007598758
      %v522 = vrot.slane %v520, 1
      %v524 = vadd.f32 %v499, %v522
      %v525 = vmul.f32 %v236, 0.0010283801
      %v527 = vrot.slane %v525, 2
      %v529 = vadd.f32 %v504, %v527
      %v530 = vmul.f32 %v238, 0.0010283801
      %v532 = vrot.slane %v530, 2
      %v534 = vadd.f32 %v509, %v532
      %v535 = vmul.f32 %v316, 0.0010283801
      %v537 = vrot.slane %v535, 2
      %v539 = vadd.f32 %v514, %v537
      %v540 = vmul.f32 %v326, 0.0010283801
      %v542 = vrot.slane %v540, 2
      %v544 = vadd.f32 %v519, %v542
      %v545 = vmul.f32 %v336, 0.0010283801
      %v547 = vrot.slane %v545, 2
      %v549 = vadd.f32 %v524, %v547
      %v550 = vmul.f32 %v529, 0.0010283801
      %v551 = vmul.f32 %v534, 0.0010283801
      %v552 = vmul.f32 %v539, 0.0010283801
      %v553 = vmul.f32 %v544, 0.0010283801
      %v554 = vmul.f32 %v549, 0.0010283801
      %555 = vrot.lane.b32.xlu0 %v529, 127
      %v556 = vpop.permute.xlu0 %555
      %v557 = vmul.f32 %v556, 0.007598758
      %v558 = vadd.f32 %v550, %v557
      %559 = vrot.lane.b32.xlu0 %v534, 127
      %v560 = vpop.permute.xlu0 %559
      %v561 = vmul.f32 %v560, 0.007598758
      %v562 = vadd.f32 %v551, %v561
      %563 = vrot.lane.b32.xlu0 %v539, 127
      %v564 = vpop.permute.xlu0 %563
      %v565 = vmul.f32 %v564, 0.007598758
      %v566 = vadd.f32 %v552, %v565
      %567 = vrot.lane.b32.xlu0 %v544, 127
      %v568 = vpop.permute.xlu0 %567
      %v569 = vmul.f32 %v568, 0.007598758
      %v570 = vadd.f32 %v553, %v569
      %571 = vrot.lane.b32.xlu0 %v549, 127
      %v572 = vpop.permute.xlu0 %571
      %v573 = vmul.f32 %v572, 0.007598758
      %v574 = vadd.f32 %v554, %v573
      %575 = vrot.lane.b32.xlu0 %v529, 126
      %v576 = vpop.permute.xlu0 %575
      %v577 = vmul.f32 %v576, 0.036000773
      %v578 = vadd.f32 %v558, %v577
      %579 = vrot.lane.b32.xlu0 %v534, 126
      %v580 = vpop.permute.xlu0 %579
      %v581 = vmul.f32 %v580, 0.036000773
      %v582 = vadd.f32 %v562, %v581
      %583 = vrot.lane.b32.xlu0 %v539, 126
      %v584 = vpop.permute.xlu0 %583
      %v585 = vmul.f32 %v584, 0.036000773
      %v586 = vadd.f32 %v566, %v585
      %587 = vrot.lane.b32.xlu0 %v544, 126
      %v588 = vpop.permute.xlu0 %587
      %v589 = vmul.f32 %v588, 0.036000773
      %v590 = vadd.f32 %v570, %v589
      %591 = vrot.lane.b32.xlu0 %v549, 126
      %v592 = vpop.permute.xlu0 %591
      %v593 = vmul.f32 %v592, 0.036000773
      %v594 = vadd.f32 %v574, %v593
      %595 = vrot.lane.b32.xlu0 %v529, 125
      %v596 = vpop.permute.xlu0 %595
      %v597 = vmul.f32 %v596, 0.10936069
      %v598 = vadd.f32 %v578, %v597
      %599 = vrot.lane.b32.xlu0 %v534, 125
      %v600 = vpop.permute.xlu0 %599
      %v601 = vmul.f32 %v600, 0.10936069
      %v602 = vadd.f32 %v582, %v601
      %603 = vrot.lane.b32.xlu0 %v539, 125
      %v604 = vpop.permute.xlu0 %603
      %v605 = vmul.f32 %v604, 0.10936069
      %v606 = vadd.f32 %v586, %v605
      %607 = vrot.lane.b32.xlu0 %v544, 125
      %v608 = vpop.permute.xlu0 %607
      %v609 = vmul.f32 %v608, 0.10936069
      %v610 = vadd.f32 %v590, %v609
      %611 = vrot.lane.b32.xlu0 %v549, 125
      %v612 = vpop.permute.xlu0 %611
      %v613 = vmul.f32 %v612, 0.10936069
      %v614 = vadd.f32 %v594, %v613
      %615 = vrot.lane.b32.xlu0 %v529, 124
      %v616 = vpop.permute.xlu0 %615
      %v617 = vmul.f32 %v616, 0.21300554
      %v618 = vadd.f32 %v598, %v617
      %619 = vrot.lane.b32.xlu0 %v534, 124
      %v620 = vpop.permute.xlu0 %619
      %v621 = vmul.f32 %v620, 0.21300554
      %v622 = vadd.f32 %v602, %v621
      %623 = vrot.lane.b32.xlu0 %v539, 124
      %v624 = vpop.permute.xlu0 %623
      %v625 = vmul.f32 %v624, 0.21300554
      %v626 = vadd.f32 %v606, %v625
      %627 = vrot.lane.b32.xlu0 %v544, 124
      %v628 = vpop.permute.xlu0 %627
      %v629 = vmul.f32 %v628, 0.21300554
      %v630 = vadd.f32 %v610, %v629
      %631 = vrot.lane.b32.xlu0 %v549, 124
      %v632 = vpop.permute.xlu0 %631
      %v633 = vmul.f32 %v632, 0.21300554
      %v634 = vadd.f32 %v614, %v633
      %635 = vrot.lane.b32.xlu0 %v529, 123
      %v636 = vpop.permute.xlu0 %635
      %v637 = vmul.f32 %v636, 0.26601171
      %v638 = vadd.f32 %v618, %v637
      %639 = vrot.lane.b32.xlu0 %v534, 123
      %v640 = vpop.permute.xlu0 %639
      %v641 = vmul.f32 %v640, 0.26601171
      %v642 = vadd.f32 %v622, %v641
      %643 = vrot.lane.b32.xlu0 %v539, 123
      %v644 = vpop.permute.xlu0 %643
      %v645 = vmul.f32 %v644, 0.26601171
      %v646 = vadd.f32 %v626, %v645
      %647 = vrot.lane.b32.xlu0 %v544, 123
      %v648 = vpop.permute.xlu0 %647
      %v649 = vmul.f32 %v648, 0.26601171
      %v650 = vadd.f32 %v630, %v649
      %651 = vrot.lane.b32.xlu0 %v549, 123
      %v652 = vpop.permute.xlu0 %651
      %v653 = vmul.f32 %v652, 0.26601171
      %v654 = vadd.f32 %v634, %v653
      %655 = vrot.lane.b32.xlu0 %v529, 122
      %v656 = vpop.permute.xlu0 %655
      %v657 = vmul.f32 %v656, 0.21300554
      %v658 = vadd.f32 %v638, %v657
      %659 = vrot.lane.b32.xlu0 %v534, 122
      %v660 = vpop.permute.xlu0 %659
      %v661 = vmul.f32 %v660, 0.21300554
      %v662 = vadd.f32 %v642, %v661
      %663 = vrot.lane.b32.xlu0 %v539, 122
      %v664 = vpop.permute.xlu0 %663
      %v665 = vmul.f32 %v664, 0.21300554
      %v666 = vadd.f32 %v646, %v665
      %667 = vrot.lane.b32.xlu0 %v544, 122
      %v668 = vpop.permute.xlu0 %667
      %v669 = vmul.f32 %v668, 0.21300554
      %v670 = vadd.f32 %v650, %v669
      %671 = vrot.lane.b32.xlu0 %v549, 122
      %v672 = vpop.permute.xlu0 %671
      %v673 = vmul.f32 %v672, 0.21300554
      %v674 = vadd.f32 %v654, %v673
      %675 = vrot.lane.b32.xlu0 %v529, 121
      %v676 = vpop.permute.xlu0 %675
      %v677 = vmul.f32 %v676, 0.10936069
      %v678 = vadd.f32 %v658, %v677
      %679 = vrot.lane.b32.xlu0 %v534, 121
      %v680 = vpop.permute.xlu0 %679
      %v681 = vmul.f32 %v680, 0.10936069
      %v682 = vadd.f32 %v662, %v681
      %683 = vrot.lane.b32.xlu0 %v539, 121
      %v684 = vpop.permute.xlu0 %683
      %v685 = vmul.f32 %v684, 0.10936069
      %v686 = vadd.f32 %v666, %v685
      %687 = vrot.lane.b32.xlu0 %v544, 121
      %v688 = vpop.permute.xlu0 %687
      %v689 = vmul.f32 %v688, 0.10936069
      %v690 = vadd.f32 %v670, %v689
      %691 = vrot.lane.b32.xlu0 %v549, 121
      %v692 = vpop.permute.xlu0 %691
      %v693 = vmul.f32 %v692, 0.10936069
      %v694 = vadd.f32 %v674, %v693
      %695 = vrot.lane.b32.xlu0 %v529, 120
      %v696 = vpop.permute.xlu0 %695
      %v697 = vmul.f32 %v696, 0.036000773
      %v698 = vadd.f32 %v678, %v697
      %699 = vrot.lane.b32.xlu0 %v534, 120
      %v700 = vpop.permute.xlu0 %699
      %v701 = vmul.f32 %v700, 0.036000773
      %v702 = vadd.f32 %v682, %v701
      %703 = vrot.lane.b32.xlu0 %v539, 120
      %v704 = vpop.permute.xlu0 %703
      %v705 = vmul.f32 %v704, 0.036000773
      %v706 = vadd.f32 %v686, %v705
      %707 = vrot.lane.b32.xlu0 %v544, 120
      %v708 = vpop.permute.xlu0 %707
      %v709 = vmul.f32 %v708, 0.036000773
      %v710 = vadd.f32 %v690, %v709
      %711 = vrot.lane.b32.xlu0 %v549, 120
      %v712 = vpop.permute.xlu0 %711
      %v713 = vmul.f32 %v712, 0.036000773
      %v714 = vadd.f32 %v694, %v713
      %715 = vrot.lane.b32.xlu0 %v529, 119
      %v716 = vpop.permute.xlu0 %715
      %v717 = vmul.f32 %v716, 0.007598758
      %v718 = vadd.f32 %v698, %v717
      %719 = vrot.lane.b32.xlu0 %v534, 119
      %v720 = vpop.permute.xlu0 %719
      %v721 = vmul.f32 %v720, 0.007598758
      %v722 = vadd.f32 %v702, %v721
      %723 = vrot.lane.b32.xlu0 %v539, 119
      %v724 = vpop.permute.xlu0 %723
      %v725 = vmul.f32 %v724, 0.007598758
      %v726 = vadd.f32 %v706, %v725
      %727 = vrot.lane.b32.xlu0 %v544, 119
      %v728 = vpop.permute.xlu0 %727
      %v729 = vmul.f32 %v728, 0.007598758
      %v730 = vadd.f32 %v710, %v729
      %731 = vrot.lane.b32.xlu0 %v549, 119
      %v732 = vpop.permute.xlu0 %731
      %v733 = vmul.f32 %v732, 0.007598758
      %v734 = vadd.f32 %v714, %v733
      %735 = vrot.lane.b32.xlu0 %v529, 118
      %v736 = vpop.permute.xlu0 %735
      %v737 = vmul.f32 %v736, 0.0010283801
      %v738 = vadd.f32 %v718, %v737
      %739 = vrot.lane.b32.xlu0 %v534, 118
      %v740 = vpop.permute.xlu0 %739
      %v741 = vmul.f32 %v740, 0.0010283801
      %v742 = vadd.f32 %v722, %v741
      %743 = vrot.lane.b32.xlu0 %v539, 118
      %v744 = vpop.permute.xlu0 %743
      %v745 = vmul.f32 %v744, 0.0010283801
      %v746 = vadd.f32 %v726, %v745
      %747 = vrot.lane.b32.xlu0 %v544, 118
      %v748 = vpop.permute.xlu0 %747
      %v749 = vmul.f32 %v748, 0.0010283801
      %v750 = vadd.f32 %v730, %v749
      %751 = vrot.lane.b32.xlu0 %v549, 118
      %v752 = vpop.permute.xlu0 %751
      %v753 = vmul.f32 %v752, 0.0010283801
      %v754 = vadd.f32 %v734, %v753
      %v755 = vmul.f32 %v738, %v738
      %v756 = vmul.f32 %v742, %v742
      %v757 = vmul.f32 %v738, %v742
      %v758 = vsub.f32 %v746, %v755
      %v759 = vsub.f32 %v750, %v756
      %v760 = vsub.f32 %v754, %v757
      %v761 = vmul.f32 %v757, 2.0
      %v762 = vadd.f32 %v761, 0.0001
      %v763 = vmul.f32 %v760, 2.0
      %v764 = vadd.f32 %v763, 0.0009
      %v765 = vmul.f32 %v762, %v764
      %v766 = vadd.f32 %v755, %v756
      %v767 = vadd.f32 %v766, 0.0001
      %v768 = vadd.f32 %v758, %v759
      %v769 = vadd.f32 %v768, 0.0009
      %v770 = vmul.f32 %v767, %v769
      %v771 = vrcp.pop %v770
      %v772 = vmul.f32 %v770, %v771
      %v773 = vsub.f32 2.0, %v772
      %v774 = vmul.f32 %v771, %v773
      %v775 = vmul.f32 %v765, %v774
      %v776 = vld [vmem:[%s0] sm:$0x1]
      %v778 = vlaneseq
      %v779 = vshrl.u32 %v778, 7
      %v780 = vsub.s32 0, %v779
      %v781 = vrot.slane %v776, %v780
      %v783 = vmul.f32 %v775, %v781
      %vm784 = vcmask 1045504
      %v785 = vsel %vm784, %v783, 0.0
      %786 = vadd.xlane.f32.xlu0 %v785
      %v787 = vpop.xlane.xlu0 %786
      %v788 = vrot.slane %v787, 4
      %v789 = vadd.f32 %v787, %v788
      %v790 = vrot.slane %v789, 2
      %v791 = vadd.f32 %v789, %v790
      %v792 = vrot.slane %v791, 1
      %v793 = vadd.f32 %v791, %v792
      %s794 = vtos %v793
      %v795 = vstv %s794
      %796 = vst [vmem:[%s234] sm:$0x1] %v795
      %p797 = scmp.lt.s32.totalorder %s18, 1
      %s798 = scalar_select %p797, %s18, 1
      %p799 = scmp.lt.s32.totalorder %s19, 0
      %s800 = scalar_select %p799, %s19, 0
      %s801 = sadd.s32 %s800, %s798
      %s802 = scalar_lea.vmem %s3, %s801
      // Predicated region
      $region33: #{ssim_loss.1} parent=31 // pred_check
        %p803 = pneg %p123
      $region34: #{ssim_loss.1} parent=31 // pred_check_branch
        %805 = sbr.rel (%p803) target = $region36
      $region35: #{ssim_loss.1} parent=31 // pred_region
        _
      $region36: #{ssim_loss.1} parent=31 // pred_fallthru
        _
    $region32: #{ssim_loss.1} parent=5 // pred_fallthru
      _
    %p806 = scmp.le.s32.totalorder 2, %s9
    // Predicated region
    $region37: #{ssim_loss.1} parent=5 // pred_check
      %p807 = pneg %p806
    $region38: #{ssim_loss.1} parent=5 // pred_check_branch
      %809 = sbr.rel (%p807) target = $region40
    $region39: #{ssim_loss.1} parent=5 // pred_region
      %s810 = ssub.s32 %s9, 2
      // Predicated region
      $region41: #{ssim_loss.1} parent=39 // pred_check
        %p811 = pneg %p129
      $region42: #{ssim_loss.1} parent=39 // pred_check_branch
        %813 = sbr.rel (%p811) target = $region44
      $region43: #{ssim_loss.1} parent=39 // pred_region
        %p814 = scmp.lt.s32.totalorder %s20, 1
        %s815 = scalar_select %p814, %s20, 1
        %p816 = scmp.lt.s32.totalorder %s21, 0
        %s817 = scalar_select %p816, %s21, 0
        %s818 = sadd.s32 %s817, %s815
        %s819 = scalar_lea.vmem %s3, %s818
      $region44: #{ssim_loss.1} parent=39 // pred_fallthru
        _
    $region40: #{ssim_loss.1} parent=5 // pred_fallthru
      _
  $region6: #{ssim_loss.1} parent=0 // loop_footer
    %s13 = sadd.s32 1, %s9
  $region7: #{ssim_loss.1} parent=0 // loop_footer_branch
    %8 = sbr.rel target = $region3
  $region8: #{ssim_loss.1} parent=0 // loop_exit
    _

</llo_original>
